<compile_context>
chip_gen: v5e
topology: v5e:2x2
jax: 0.10.0
libtpu: 0.0.40
codegen_flags: <defaults>
</compile_context>

<pallas_src>
import jax
import jax.numpy as jnp
from jax.experimental import pallas as pl
from jax.experimental.pallas import tpu as pltpu

EPS = 1e-5             # nn.InstanceNorm2d default eps
LEAKY_SLOPE = 0.01     # nn.LeakyReLU() default negative_slope
RES_SCALE = 1.41
INV_RES_SCALE = 1.0 / RES_SCALE


def _taps9(X, W, HW, top, bot, left, right):
    """9 edge-clamped 3x3 taps of flattened planes X: (rows, H*W).

    taps[ky*3 + kx][c, y*W + x] == X[c, clamp(y+ky-1)*W + clamp(x+kx-1)],
    i.e. exactly the taps of a 3x3 cross-correlation with 'replicate' padding.
    Shifts use pltpu.roll along the lane-dense flattened axis (XLU); row/column
    clamping uses the hoisted iota masks.  Built once for ALL input channels.
    """
    up   = jnp.where(top, X, pltpu.roll(X, W, axis=1))           # ky = 0 (y-1)
    down = jnp.where(bot, X, pltpu.roll(X, HW - W, axis=1))      # ky = 2 (y+1)
    taps = []
    for r in (up, X, down):                                      # ky = 0,1,2
        l  = jnp.where(left,  r, pltpu.roll(r, 1, axis=1))       # kx = 0 (x-1)
        rt = jnp.where(right, r, pltpu.roll(r, HW - 1, axis=1))  # kx = 2 (x+1)
        taps.extend((l, r, rt))                                  # kx = 0,1,2
    return taps


def _make_resblock_kernel(C, OC, H, W, HW, bs):
    def kernel(x_ref, w1_ref, b1_ref, w2_ref, b2_ref, o_ref):
        # ---- hoisted out of the per-sample loop --------------------------
        W1 = w1_ref[...]          # (OC, C*9)  flattened PyTorch OIHW
        B1 = b1_ref[...]          # (OC, 1)
        W2 = w2_ref[...]          # (OC, OC*9)
        B2 = b2_ref[...]          # (OC, 1)

        # Edge-clamp masks for the replicate padding (built once from iota).
        flat = jax.lax.broadcasted_iota(jnp.int32, (C, HW), 1)
        if (W & (W - 1)) == 0:
            col = flat & (W - 1)            # W is a power of two
        else:
            col = flat % W
        top = flat < W
        bot = flat >= (H - 1) * W
        left = col == 0
        right = col == W - 1

        def conv_instnorm(X, Wmat, Bcol, cin):
            """3x3 replicate-pad conv + InstanceNorm2d (affine=False,
            biased variance, two-pass for numerical safety)."""
            taps = _taps9(X, W, HW, top, bot, left, right)   # 9 x (cin, HW)
            acc = jnp.zeros((OC, HW), jnp.float32)
            for ci in range(cin):
                for k in range(9):
                    j = ci * 9 + k
                    # (OC,1) weight column * (1,HW) tap row -> (OC,HW) FMA
                    acc = acc + Wmat[:, j:j + 1] * taps[k][ci:ci + 1, :]
            acc = acc + Bcol
            mean = jnp.mean(acc, axis=-1, keepdims=True)     # (OC, 1)
            cent = acc - mean
            var = jnp.mean(cent * cent, axis=-1, keepdims=True)
            return cent * jax.lax.rsqrt(var + EPS)

        def body(b, carry):
            X = x_ref[b]                                     # (C, HW) lane-dense
            y1 = conv_instnorm(X, W1, B1, C)
            y1 = jnp.maximum(y1, LEAKY_SLOPE * y1)           # LeakyReLU
            y2 = conv_instnorm(y1, W2, B2, OC)
            # Reload x for the residual (cheap VMEM read) rather than keeping
            # it live across both conv stages; one full-width lane-dense store.
            o_ref[b] = (x_ref[b] + y2) * INV_RES_SCALE
            return carry

        if bs == 1:
            body(0, 0)
        else:
            jax.lax.fori_loop(0, bs, body, 0)

    return kernel


def _choose_block_samples(N, C, OC, HW):
    """Samples per grid step: byte-capped (safe for v5e's 16 MiB default scoped
    VMEM and v7x's 64 MiB physical VMEM) while keeping >= min(N, 4) grid steps
    so the BlockSpec pipeline overlaps DMA with compute and both v7x
    TensorCores see >= 2 steps when N allows."""
    bytes_per_sample = 4 * (C + OC) * HW              # f32 input + output
    max_block_bytes = 2 << 20                         # ~2 MiB per block
    bs = max(1, min(N, max_block_bytes // bytes_per_sample, N // min(N, 4)))
    while N % bs:
        bs -= 1
    return bs


def res_block_forward(x, w1, b1, w2, b2):
    """Pallas TPU implementation of ResBlock.forward. x: (N, C, H, W) f32."""
    N, C, H, W = x.shape
    OC = w1.shape[0]
    HW = H * W
    assert w1.shape == (OC, C, 3, 3) and w2.shape == (OC, OC, 3, 3)
    assert b1.shape == (OC,) and b2.shape == (OC,)
    assert C == OC, "residual add requires in_c == out_c"

    # Lane-dense layout: full H*W plane on the lane axis, channels on sublanes.
    x_flat = x.reshape(N, C, HW)
    w1f = w1.reshape(OC, C * 9)
    w2f = w2.reshape(OC, OC * 9)
    b1c = b1.reshape(OC, 1)
    b2c = b2.reshape(OC, 1)

    bs = _choose_block_samples(N, C, OC, HW)
    n_blocks = N // bs

    out_flat = pl.pallas_call(
        _make_resblock_kernel(C, OC, H, W, HW, bs),
        out_shape=jax.ShapeDtypeStruct((N, OC, HW), jnp.float32),
        grid_spec=pltpu.PrefetchScalarGridSpec(
            num_scalar_prefetch=0,
            grid=(n_blocks,),
            in_specs=[
                pl.BlockSpec((bs, C, HW), lambda n: (n, 0, 0)),   # x block
                pl.BlockSpec((OC, C * 9), lambda n: (0, 0)),      # w1
                pl.BlockSpec((OC, 1), lambda n: (0, 0)),          # b1
                pl.BlockSpec((OC, OC * 9), lambda n: (0, 0)),     # w2
                pl.BlockSpec((OC, 1), lambda n: (0, 0)),          # b2
            ],
            out_specs=pl.BlockSpec((bs, OC, HW), lambda n: (n, 0, 0)),
        ),
        compiler_params=pltpu.CompilerParams(
            dimension_semantics=("parallel",)),
    )(x_flat, w1f, b1c, w2f, b2c)
    return out_flat.reshape(N, OC, H, W)


def _reference(x, w1, b1, w2, b2):
    """Pure-JAX reference matching the PyTorch module semantics."""
    def conv(inp, w, b):
        pad = jnp.pad(inp, ((0, 0), (0, 0), (1, 1), (1, 1)), mode="edge")
        y = jax.lax.conv_general_dilated(
            pad, w, window_strides=(1, 1), padding="VALID",
            dimension_numbers=("NCHW", "OIHW", "NCHW"))
        return y + b[None, :, None, None]

    def inorm(t):
        m = jnp.mean(t, axis=(2, 3), keepdims=True)
        v = jnp.mean((t - m) ** 2, axis=(2, 3), keepdims=True)
        return (t - m) / jnp.sqrt(v + EPS)

    y = conv(x, w1, b1)
    y = inorm(y)
    y = jnp.where(y > 0, y, LEAKY_SLOPE * y)
    y = conv(y, w2, b2)
    y = inorm(y)
    return (x + y) / RES_SCALE


if __name__ == "__main__":
    N, C, H, W = 2, 4, 16, 16
    OC = C  # residual requires in_c == out_c

    key = jax.random.PRNGKey(0)
    kx, kw1, kb1, kw2, kb2 = jax.random.split(key, 5)
    x = jax.random.normal(kx, (N, C, H, W), jnp.float32)
    w1 = jax.random.normal(kw1, (OC, C, 3, 3), jnp.float32) * 0.2
    b1 = jax.random.normal(kb1, (OC,), jnp.float32) * 0.1
    w2 = jax.random.normal(kw2, (OC, OC, 3, 3), jnp.float32) * 0.2
    b2 = jax.random.normal(kb2, (OC,), jnp.float32) * 0.1

    out = jax.block_until_ready(jax.jit(res_block_forward)(x, w1, b1, w2, b2))

    ref = _reference(x, w1, b1, w2, b2)
    max_err = float(jnp.max(jnp.abs(out - ref)))
    assert out.shape == (N, OC, H, W)
    assert max_err < 1e-4, f"max abs err {max_err}"
    print("KERNEL_OK")
</pallas_src>

<mosaic_0001>
module attributes {stable_mosaic.version = 11 : i64} {
  func.func @kernel(%arg0: i32, %arg1: memref<1x4x256xf32, #tpu.memory_space<vmem>>, %arg2: memref<4x36xf32, #tpu.memory_space<vmem>>, %arg3: memref<4x1xf32, #tpu.memory_space<vmem>>, %arg4: memref<4x36xf32, #tpu.memory_space<vmem>>, %arg5: memref<4x1xf32, #tpu.memory_space<vmem>>, %arg6: memref<1x4x256xf32, #tpu.memory_space<vmem>>) attributes {dimension_semantics = [#tpu.dimension_semantics<parallel>], iteration_bounds = array<i64: 2>, scalar_prefetch = 0 : i64, scratch_operands = 0 : i64, tpu.core_type = #tpu.core_type<tc>, window_params = [{transform_indices = @transform_0, window_bounds = array<i64: 1, 4, 256>}, {pipeline_mode = #tpu.pipeline_mode<synchronous>, transform_indices = @transform_1, window_bounds = array<i64: 4, 36>}, {pipeline_mode = #tpu.pipeline_mode<synchronous>, transform_indices = @transform_2, window_bounds = array<i64: 4, 1>}, {pipeline_mode = #tpu.pipeline_mode<synchronous>, transform_indices = @transform_3, window_bounds = array<i64: 4, 36>}, {pipeline_mode = #tpu.pipeline_mode<synchronous>, transform_indices = @transform_4, window_bounds = array<i64: 4, 1>}, {transform_indices = @transform_5, window_bounds = array<i64: 1, 4, 256>}]} {
    %c0 = arith.constant 0 : index
    %c0_0 = arith.constant 0 : index
    %0 = vector.load %arg2[%c0, %c0_0] : memref<4x36xf32, #tpu.memory_space<vmem>>, vector<4x36xf32>
    %c0_1 = arith.constant 0 : index
    %c0_2 = arith.constant 0 : index
    %1 = vector.load %arg3[%c0_1, %c0_2] : memref<4x1xf32, #tpu.memory_space<vmem>>, vector<4x1xf32>
    %c0_3 = arith.constant 0 : index
    %c0_4 = arith.constant 0 : index
    %2 = vector.load %arg4[%c0_3, %c0_4] : memref<4x36xf32, #tpu.memory_space<vmem>>, vector<4x36xf32>
    %c0_5 = arith.constant 0 : index
    %c0_6 = arith.constant 0 : index
    %3 = vector.load %arg5[%c0_5, %c0_6] : memref<4x1xf32, #tpu.memory_space<vmem>>, vector<4x1xf32>
    %4 = tpu.iota {dimensions = array<i32: 1>} : vector<4x256xi32>
    %c15_i32 = arith.constant 15 : i32
    %5 = vector.broadcast %c15_i32 : i32 to vector<4x256xi32>
    %6 = arith.andi %4, %5 : vector<4x256xi32>
    %c16_i32 = arith.constant 16 : i32
    %7 = vector.broadcast %c16_i32 : i32 to vector<4x256xi32>
    %8 = arith.cmpi slt, %4, %7 : vector<4x256xi32>
    %c240_i32 = arith.constant 240 : i32
    %9 = vector.broadcast %c240_i32 : i32 to vector<4x256xi32>
    %10 = arith.cmpi sge, %4, %9 : vector<4x256xi32>
    %c0_i32 = arith.constant 0 : i32
    %11 = vector.broadcast %c0_i32 : i32 to vector<4x256xi32>
    %12 = arith.cmpi eq, %6, %11 : vector<4x256xi32>
    %c15_i32_7 = arith.constant 15 : i32
    %13 = vector.broadcast %c15_i32_7 : i32 to vector<4x256xi32>
    %14 = arith.cmpi eq, %6, %13 : vector<4x256xi32>
    %c0_8 = arith.constant 0 : index
    %c0_9 = arith.constant 0 : index
    %c0_10 = arith.constant 0 : index
    %15 = vector.load %arg1[%c0_8, %c0_9, %c0_10] : memref<1x4x256xf32, #tpu.memory_space<vmem>>, vector<1x4x256xf32>
    %16 = vector.shape_cast %15 : vector<1x4x256xf32> to vector<4x256xf32>
    %c16_i32_11 = arith.constant 16 : i32
    %17 = tpu.dynamic_rotate %16 by %c16_i32_11 dim 1 : vector<4x256xf32>, i32 -> vector<4x256xf32>
    %18 = arith.select %8, %16, %17 : vector<4x256xi1>, vector<4x256xf32>
    %c240_i32_12 = arith.constant 240 : i32
    %19 = tpu.dynamic_rotate %16 by %c240_i32_12 dim 1 : vector<4x256xf32>, i32 -> vector<4x256xf32>
    %20 = arith.select %10, %16, %19 : vector<4x256xi1>, vector<4x256xf32>
    %c1_i32 = arith.constant 1 : i32
    %21 = tpu.dynamic_rotate %18 by %c1_i32 dim 1 : vector<4x256xf32>, i32 -> vector<4x256xf32>
    %22 = arith.select %12, %18, %21 : vector<4x256xi1>, vector<4x256xf32>
    %c255_i32 = arith.constant 255 : i32
    %23 = tpu.dynamic_rotate %18 by %c255_i32 dim 1 : vector<4x256xf32>, i32 -> vector<4x256xf32>
    %24 = arith.select %14, %18, %23 : vector<4x256xi1>, vector<4x256xf32>
    %c1_i32_13 = arith.constant 1 : i32
    %25 = tpu.dynamic_rotate %16 by %c1_i32_13 dim 1 : vector<4x256xf32>, i32 -> vector<4x256xf32>
    %26 = arith.select %12, %16, %25 : vector<4x256xi1>, vector<4x256xf32>
    %c255_i32_14 = arith.constant 255 : i32
    %27 = tpu.dynamic_rotate %16 by %c255_i32_14 dim 1 : vector<4x256xf32>, i32 -> vector<4x256xf32>
    %28 = arith.select %14, %16, %27 : vector<4x256xi1>, vector<4x256xf32>
    %c1_i32_15 = arith.constant 1 : i32
    %29 = tpu.dynamic_rotate %20 by %c1_i32_15 dim 1 : vector<4x256xf32>, i32 -> vector<4x256xf32>
    %30 = arith.select %12, %20, %29 : vector<4x256xi1>, vector<4x256xf32>
    %c255_i32_16 = arith.constant 255 : i32
    %31 = tpu.dynamic_rotate %20 by %c255_i32_16 dim 1 : vector<4x256xf32>, i32 -> vector<4x256xf32>
    %32 = arith.select %14, %20, %31 : vector<4x256xi1>, vector<4x256xf32>
    %cst = arith.constant 0.000000e+00 : f32
    %33 = vector.broadcast %cst : f32 to vector<4x256xf32>
    %34 = vector.extract_strided_slice %0 {offsets = [0, 0], sizes = [4, 1], strides = [1, 1]} : vector<4x36xf32> to vector<4x1xf32>
    %35 = vector.extract_strided_slice %22 {offsets = [0, 0], sizes = [1, 256], strides = [1, 1]} : vector<4x256xf32> to vector<1x256xf32>
    %36 = vector.broadcast %34 : vector<4x1xf32> to vector<4x256xf32>
    %37 = vector.broadcast %35 : vector<1x256xf32> to vector<4x256xf32>
    %38 = arith.mulf %36, %37 : vector<4x256xf32>
    %39 = arith.addf %33, %38 : vector<4x256xf32>
    %40 = vector.extract_strided_slice %0 {offsets = [0, 1], sizes = [4, 1], strides = [1, 1]} : vector<4x36xf32> to vector<4x1xf32>
    %41 = vector.extract_strided_slice %18 {offsets = [0, 0], sizes = [1, 256], strides = [1, 1]} : vector<4x256xf32> to vector<1x256xf32>
    %42 = vector.broadcast %40 : vector<4x1xf32> to vector<4x256xf32>
    %43 = vector.broadcast %41 : vector<1x256xf32> to vector<4x256xf32>
    %44 = arith.mulf %42, %43 : vector<4x256xf32>
    %45 = arith.addf %39, %44 : vector<4x256xf32>
    %46 = vector.extract_strided_slice %0 {offsets = [0, 2], sizes = [4, 1], strides = [1, 1]} : vector<4x36xf32> to vector<4x1xf32>
    %47 = vector.extract_strided_slice %24 {offsets = [0, 0], sizes = [1, 256], strides = [1, 1]} : vector<4x256xf32> to vector<1x256xf32>
    %48 = vector.broadcast %46 : vector<4x1xf32> to vector<4x256xf32>
    %49 = vector.broadcast %47 : vector<1x256xf32> to vector<4x256xf32>
    %50 = arith.mulf %48, %49 : vector<4x256xf32>
    %51 = arith.addf %45, %50 : vector<4x256xf32>
    %52 = vector.extract_strided_slice %0 {offsets = [0, 3], sizes = [4, 1], strides = [1, 1]} : vector<4x36xf32> to vector<4x1xf32>
    %53 = vector.extract_strided_slice %26 {offsets = [0, 0], sizes = [1, 256], strides = [1, 1]} : vector<4x256xf32> to vector<1x256xf32>
    %54 = vector.broadcast %52 : vector<4x1xf32> to vector<4x256xf32>
    %55 = vector.broadcast %53 : vector<1x256xf32> to vector<4x256xf32>
    %56 = arith.mulf %54, %55 : vector<4x256xf32>
    %57 = arith.addf %51, %56 : vector<4x256xf32>
    %58 = vector.extract_strided_slice %0 {offsets = [0, 4], sizes = [4, 1], strides = [1, 1]} : vector<4x36xf32> to vector<4x1xf32>
    %59 = vector.extract_strided_slice %16 {offsets = [0, 0], sizes = [1, 256], strides = [1, 1]} : vector<4x256xf32> to vector<1x256xf32>
    %60 = vector.broadcast %58 : vector<4x1xf32> to vector<4x256xf32>
    %61 = vector.broadcast %59 : vector<1x256xf32> to vector<4x256xf32>
    %62 = arith.mulf %60, %61 : vector<4x256xf32>
    %63 = arith.addf %57, %62 : vector<4x256xf32>
    %64 = vector.extract_strided_slice %0 {offsets = [0, 5], sizes = [4, 1], strides = [1, 1]} : vector<4x36xf32> to vector<4x1xf32>
    %65 = vector.extract_strided_slice %28 {offsets = [0, 0], sizes = [1, 256], strides = [1, 1]} : vector<4x256xf32> to vector<1x256xf32>
    %66 = vector.broadcast %64 : vector<4x1xf32> to vector<4x256xf32>
    %67 = vector.broadcast %65 : vector<1x256xf32> to vector<4x256xf32>
    %68 = arith.mulf %66, %67 : vector<4x256xf32>
    %69 = arith.addf %63, %68 : vector<4x256xf32>
    %70 = vector.extract_strided_slice %0 {offsets = [0, 6], sizes = [4, 1], strides = [1, 1]} : vector<4x36xf32> to vector<4x1xf32>
    %71 = vector.extract_strided_slice %30 {offsets = [0, 0], sizes = [1, 256], strides = [1, 1]} : vector<4x256xf32> to vector<1x256xf32>
    %72 = vector.broadcast %70 : vector<4x1xf32> to vector<4x256xf32>
    %73 = vector.broadcast %71 : vector<1x256xf32> to vector<4x256xf32>
    %74 = arith.mulf %72, %73 : vector<4x256xf32>
    %75 = arith.addf %69, %74 : vector<4x256xf32>
    %76 = vector.extract_strided_slice %0 {offsets = [0, 7], sizes = [4, 1], strides = [1, 1]} : vector<4x36xf32> to vector<4x1xf32>
    %77 = vector.extract_strided_slice %20 {offsets = [0, 0], sizes = [1, 256], strides = [1, 1]} : vector<4x256xf32> to vector<1x256xf32>
    %78 = vector.broadcast %76 : vector<4x1xf32> to vector<4x256xf32>
    %79 = vector.broadcast %77 : vector<1x256xf32> to vector<4x256xf32>
    %80 = arith.mulf %78, %79 : vector<4x256xf32>
    %81 = arith.addf %75, %80 : vector<4x256xf32>
    %82 = vector.extract_strided_slice %0 {offsets = [0, 8], sizes = [4, 1], strides = [1, 1]} : vector<4x36xf32> to vector<4x1xf32>
    %83 = vector.extract_strided_slice %32 {offsets = [0, 0], sizes = [1, 256], strides = [1, 1]} : vector<4x256xf32> to vector<1x256xf32>
    %84 = vector.broadcast %82 : vector<4x1xf32> to vector<4x256xf32>
    %85 = vector.broadcast %83 : vector<1x256xf32> to vector<4x256xf32>
    %86 = arith.mulf %84, %85 : vector<4x256xf32>
    %87 = arith.addf %81, %86 : vector<4x256xf32>
    %88 = vector.extract_strided_slice %0 {offsets = [0, 9], sizes = [4, 1], strides = [1, 1]} : vector<4x36xf32> to vector<4x1xf32>
    %89 = vector.extract_strided_slice %22 {offsets = [1, 0], sizes = [1, 256], strides = [1, 1]} : vector<4x256xf32> to vector<1x256xf32>
    %90 = vector.broadcast %88 : vector<4x1xf32> to vector<4x256xf32>
    %91 = vector.broadcast %89 : vector<1x256xf32> to vector<4x256xf32>
    %92 = arith.mulf %90, %91 : vector<4x256xf32>
    %93 = arith.addf %87, %92 : vector<4x256xf32>
    %94 = vector.extract_strided_slice %0 {offsets = [0, 10], sizes = [4, 1], strides = [1, 1]} : vector<4x36xf32> to vector<4x1xf32>
    %95 = vector.extract_strided_slice %18 {offsets = [1, 0], sizes = [1, 256], strides = [1, 1]} : vector<4x256xf32> to vector<1x256xf32>
    %96 = vector.broadcast %94 : vector<4x1xf32> to vector<4x256xf32>
    %97 = vector.broadcast %95 : vector<1x256xf32> to vector<4x256xf32>
    %98 = arith.mulf %96, %97 : vector<4x256xf32>
    %99 = arith.addf %93, %98 : vector<4x256xf32>
    %100 = vector.extract_strided_slice %0 {offsets = [0, 11], sizes = [4, 1], strides = [1, 1]} : vector<4x36xf32> to vector<4x1xf32>
    %101 = vector.extract_strided_slice %24 {offsets = [1, 0], sizes = [1, 256], strides = [1, 1]} : vector<4x256xf32> to vector<1x256xf32>
    %102 = vector.broadcast %100 : vector<4x1xf32> to vector<4x256xf32>
    %103 = vector.broadcast %101 : vector<1x256xf32> to vector<4x256xf32>
    %104 = arith.mulf %102, %103 : vector<4x256xf32>
    %105 = arith.addf %99, %104 : vector<4x256xf32>
    %106 = vector.extract_strided_slice %0 {offsets = [0, 12], sizes = [4, 1], strides = [1, 1]} : vector<4x36xf32> to vector<4x1xf32>
    %107 = vector.extract_strided_slice %26 {offsets = [1, 0], sizes = [1, 256], strides = [1, 1]} : vector<4x256xf32> to vector<1x256xf32>
    %108 = vector.broadcast %106 : vector<4x1xf32> to vector<4x256xf32>
    %109 = vector.broadcast %107 : vector<1x256xf32> to vector<4x256xf32>
    %110 = arith.mulf %108, %109 : vector<4x256xf32>
    %111 = arith.addf %105, %110 : vector<4x256xf32>
    %112 = vector.extract_strided_slice %0 {offsets = [0, 13], sizes = [4, 1], strides = [1, 1]} : vector<4x36xf32> to vector<4x1xf32>
    %113 = vector.extract_strided_slice %16 {offsets = [1, 0], sizes = [1, 256], strides = [1, 1]} : vector<4x256xf32> to vector<1x256xf32>
    %114 = vector.broadcast %112 : vector<4x1xf32> to vector<4x256xf32>
    %115 = vector.broadcast %113 : vector<1x256xf32> to vector<4x256xf32>
    %116 = arith.mulf %114, %115 : vector<4x256xf32>
    %117 = arith.addf %111, %116 : vector<4x256xf32>
    %118 = vector.extract_strided_slice %0 {offsets = [0, 14], sizes = [4, 1], strides = [1, 1]} : vector<4x36xf32> to vector<4x1xf32>
    %119 = vector.extract_strided_slice %28 {offsets = [1, 0], sizes = [1, 256], strides = [1, 1]} : vector<4x256xf32> to vector<1x256xf32>
    %120 = vector.broadcast %118 : vector<4x1xf32> to vector<4x256xf32>
    %121 = vector.broadcast %119 : vector<1x256xf32> to vector<4x256xf32>
    %122 = arith.mulf %120, %121 : vector<4x256xf32>
    %123 = arith.addf %117, %122 : vector<4x256xf32>
    %124 = vector.extract_strided_slice %0 {offsets = [0, 15], sizes = [4, 1], strides = [1, 1]} : vector<4x36xf32> to vector<4x1xf32>
    %125 = vector.extract_strided_slice %30 {offsets = [1, 0], sizes = [1, 256], strides = [1, 1]} : vector<4x256xf32> to vector<1x256xf32>
    %126 = vector.broadcast %124 : vector<4x1xf32> to vector<4x256xf32>
    %127 = vector.broadcast %125 : vector<1x256xf32> to vector<4x256xf32>
    %128 = arith.mulf %126, %127 : vector<4x256xf32>
    %129 = arith.addf %123, %128 : vector<4x256xf32>
    %130 = vector.extract_strided_slice %0 {offsets = [0, 16], sizes = [4, 1], strides = [1, 1]} : vector<4x36xf32> to vector<4x1xf32>
    %131 = vector.extract_strided_slice %20 {offsets = [1, 0], sizes = [1, 256], strides = [1, 1]} : vector<4x256xf32> to vector<1x256xf32>
    %132 = vector.broadcast %130 : vector<4x1xf32> to vector<4x256xf32>
    %133 = vector.broadcast %131 : vector<1x256xf32> to vector<4x256xf32>
    %134 = arith.mulf %132, %133 : vector<4x256xf32>
    %135 = arith.addf %129, %134 : vector<4x256xf32>
    %136 = vector.extract_strided_slice %0 {offsets = [0, 17], sizes = [4, 1], strides = [1, 1]} : vector<4x36xf32> to vector<4x1xf32>
    %137 = vector.extract_strided_slice %32 {offsets = [1, 0], sizes = [1, 256], strides = [1, 1]} : vector<4x256xf32> to vector<1x256xf32>
    %138 = vector.broadcast %136 : vector<4x1xf32> to vector<4x256xf32>
    %139 = vector.broadcast %137 : vector<1x256xf32> to vector<4x256xf32>
    %140 = arith.mulf %138, %139 : vector<4x256xf32>
    %141 = arith.addf %135, %140 : vector<4x256xf32>
    %142 = vector.extract_strided_slice %0 {offsets = [0, 18], sizes = [4, 1], strides = [1, 1]} : vector<4x36xf32> to vector<4x1xf32>
    %143 = vector.extract_strided_slice %22 {offsets = [2, 0], sizes = [1, 256], strides = [1, 1]} : vector<4x256xf32> to vector<1x256xf32>
    %144 = vector.broadcast %142 : vector<4x1xf32> to vector<4x256xf32>
    %145 = vector.broadcast %143 : vector<1x256xf32> to vector<4x256xf32>
    %146 = arith.mulf %144, %145 : vector<4x256xf32>
    %147 = arith.addf %141, %146 : vector<4x256xf32>
    %148 = vector.extract_strided_slice %0 {offsets = [0, 19], sizes = [4, 1], strides = [1, 1]} : vector<4x36xf32> to vector<4x1xf32>
    %149 = vector.extract_strided_slice %18 {offsets = [2, 0], sizes = [1, 256], strides = [1, 1]} : vector<4x256xf32> to vector<1x256xf32>
    %150 = vector.broadcast %148 : vector<4x1xf32> to vector<4x256xf32>
    %151 = vector.broadcast %149 : vector<1x256xf32> to vector<4x256xf32>
    %152 = arith.mulf %150, %151 : vector<4x256xf32>
    %153 = arith.addf %147, %152 : vector<4x256xf32>
    %154 = vector.extract_strided_slice %0 {offsets = [0, 20], sizes = [4, 1], strides = [1, 1]} : vector<4x36xf32> to vector<4x1xf32>
    %155 = vector.extract_strided_slice %24 {offsets = [2, 0], sizes = [1, 256], strides = [1, 1]} : vector<4x256xf32> to vector<1x256xf32>
    %156 = vector.broadcast %154 : vector<4x1xf32> to vector<4x256xf32>
    %157 = vector.broadcast %155 : vector<1x256xf32> to vector<4x256xf32>
    %158 = arith.mulf %156, %157 : vector<4x256xf32>
    %159 = arith.addf %153, %158 : vector<4x256xf32>
    %160 = vector.extract_strided_slice %0 {offsets = [0, 21], sizes = [4, 1], strides = [1, 1]} : vector<4x36xf32> to vector<4x1xf32>
    %161 = vector.extract_strided_slice %26 {offsets = [2, 0], sizes = [1, 256], strides = [1, 1]} : vector<4x256xf32> to vector<1x256xf32>
    %162 = vector.broadcast %160 : vector<4x1xf32> to vector<4x256xf32>
    %163 = vector.broadcast %161 : vector<1x256xf32> to vector<4x256xf32>
    %164 = arith.mulf %162, %163 : vector<4x256xf32>
    %165 = arith.addf %159, %164 : vector<4x256xf32>
    %166 = vector.extract_strided_slice %0 {offsets = [0, 22], sizes = [4, 1], strides = [1, 1]} : vector<4x36xf32> to vector<4x1xf32>
    %167 = vector.extract_strided_slice %16 {offsets = [2, 0], sizes = [1, 256], strides = [1, 1]} : vector<4x256xf32> to vector<1x256xf32>
    %168 = vector.broadcast %166 : vector<4x1xf32> to vector<4x256xf32>
    %169 = vector.broadcast %167 : vector<1x256xf32> to vector<4x256xf32>
    %170 = arith.mulf %168, %169 : vector<4x256xf32>
    %171 = arith.addf %165, %170 : vector<4x256xf32>
    %172 = vector.extract_strided_slice %0 {offsets = [0, 23], sizes = [4, 1], strides = [1, 1]} : vector<4x36xf32> to vector<4x1xf32>
    %173 = vector.extract_strided_slice %28 {offsets = [2, 0], sizes = [1, 256], strides = [1, 1]} : vector<4x256xf32> to vector<1x256xf32>
    %174 = vector.broadcast %172 : vector<4x1xf32> to vector<4x256xf32>
    %175 = vector.broadcast %173 : vector<1x256xf32> to vector<4x256xf32>
    %176 = arith.mulf %174, %175 : vector<4x256xf32>
    %177 = arith.addf %171, %176 : vector<4x256xf32>
    %178 = vector.extract_strided_slice %0 {offsets = [0, 24], sizes = [4, 1], strides = [1, 1]} : vector<4x36xf32> to vector<4x1xf32>
    %179 = vector.extract_strided_slice %30 {offsets = [2, 0], sizes = [1, 256], strides = [1, 1]} : vector<4x256xf32> to vector<1x256xf32>
    %180 = vector.broadcast %178 : vector<4x1xf32> to vector<4x256xf32>
    %181 = vector.broadcast %179 : vector<1x256xf32> to vector<4x256xf32>
    %182 = arith.mulf %180, %181 : vector<4x256xf32>
    %183 = arith.addf %177, %182 : vector<4x256xf32>
    %184 = vector.extract_strided_slice %0 {offsets = [0, 25], sizes = [4, 1], strides = [1, 1]} : vector<4x36xf32> to vector<4x1xf32>
    %185 = vector.extract_strided_slice %20 {offsets = [2, 0], sizes = [1, 256], strides = [1, 1]} : vector<4x256xf32> to vector<1x256xf32>
    %186 = vector.broadcast %184 : vector<4x1xf32> to vector<4x256xf32>
    %187 = vector.broadcast %185 : vector<1x256xf32> to vector<4x256xf32>
    %188 = arith.mulf %186, %187 : vector<4x256xf32>
    %189 = arith.addf %183, %188 : vector<4x256xf32>
    %190 = vector.extract_strided_slice %0 {offsets = [0, 26], sizes = [4, 1], strides = [1, 1]} : vector<4x36xf32> to vector<4x1xf32>
    %191 = vector.extract_strided_slice %32 {offsets = [2, 0], sizes = [1, 256], strides = [1, 1]} : vector<4x256xf32> to vector<1x256xf32>
    %192 = vector.broadcast %190 : vector<4x1xf32> to vector<4x256xf32>
    %193 = vector.broadcast %191 : vector<1x256xf32> to vector<4x256xf32>
    %194 = arith.mulf %192, %193 : vector<4x256xf32>
    %195 = arith.addf %189, %194 : vector<4x256xf32>
    %196 = vector.extract_strided_slice %0 {offsets = [0, 27], sizes = [4, 1], strides = [1, 1]} : vector<4x36xf32> to vector<4x1xf32>
    %197 = vector.extract_strided_slice %22 {offsets = [3, 0], sizes = [1, 256], strides = [1, 1]} : vector<4x256xf32> to vector<1x256xf32>
    %198 = vector.broadcast %196 : vector<4x1xf32> to vector<4x256xf32>
    %199 = vector.broadcast %197 : vector<1x256xf32> to vector<4x256xf32>
    %200 = arith.mulf %198, %199 : vector<4x256xf32>
    %201 = arith.addf %195, %200 : vector<4x256xf32>
    %202 = vector.extract_strided_slice %0 {offsets = [0, 28], sizes = [4, 1], strides = [1, 1]} : vector<4x36xf32> to vector<4x1xf32>
    %203 = vector.extract_strided_slice %18 {offsets = [3, 0], sizes = [1, 256], strides = [1, 1]} : vector<4x256xf32> to vector<1x256xf32>
    %204 = vector.broadcast %202 : vector<4x1xf32> to vector<4x256xf32>
    %205 = vector.broadcast %203 : vector<1x256xf32> to vector<4x256xf32>
    %206 = arith.mulf %204, %205 : vector<4x256xf32>
    %207 = arith.addf %201, %206 : vector<4x256xf32>
    %208 = vector.extract_strided_slice %0 {offsets = [0, 29], sizes = [4, 1], strides = [1, 1]} : vector<4x36xf32> to vector<4x1xf32>
    %209 = vector.extract_strided_slice %24 {offsets = [3, 0], sizes = [1, 256], strides = [1, 1]} : vector<4x256xf32> to vector<1x256xf32>
    %210 = vector.broadcast %208 : vector<4x1xf32> to vector<4x256xf32>
    %211 = vector.broadcast %209 : vector<1x256xf32> to vector<4x256xf32>
    %212 = arith.mulf %210, %211 : vector<4x256xf32>
    %213 = arith.addf %207, %212 : vector<4x256xf32>
    %214 = vector.extract_strided_slice %0 {offsets = [0, 30], sizes = [4, 1], strides = [1, 1]} : vector<4x36xf32> to vector<4x1xf32>
    %215 = vector.extract_strided_slice %26 {offsets = [3, 0], sizes = [1, 256], strides = [1, 1]} : vector<4x256xf32> to vector<1x256xf32>
    %216 = vector.broadcast %214 : vector<4x1xf32> to vector<4x256xf32>
    %217 = vector.broadcast %215 : vector<1x256xf32> to vector<4x256xf32>
    %218 = arith.mulf %216, %217 : vector<4x256xf32>
    %219 = arith.addf %213, %218 : vector<4x256xf32>
    %220 = vector.extract_strided_slice %0 {offsets = [0, 31], sizes = [4, 1], strides = [1, 1]} : vector<4x36xf32> to vector<4x1xf32>
    %221 = vector.extract_strided_slice %16 {offsets = [3, 0], sizes = [1, 256], strides = [1, 1]} : vector<4x256xf32> to vector<1x256xf32>
    %222 = vector.broadcast %220 : vector<4x1xf32> to vector<4x256xf32>
    %223 = vector.broadcast %221 : vector<1x256xf32> to vector<4x256xf32>
    %224 = arith.mulf %222, %223 : vector<4x256xf32>
    %225 = arith.addf %219, %224 : vector<4x256xf32>
    %226 = vector.extract_strided_slice %0 {offsets = [0, 32], sizes = [4, 1], strides = [1, 1]} : vector<4x36xf32> to vector<4x1xf32>
    %227 = vector.extract_strided_slice %28 {offsets = [3, 0], sizes = [1, 256], strides = [1, 1]} : vector<4x256xf32> to vector<1x256xf32>
    %228 = vector.broadcast %226 : vector<4x1xf32> to vector<4x256xf32>
    %229 = vector.broadcast %227 : vector<1x256xf32> to vector<4x256xf32>
    %230 = arith.mulf %228, %229 : vector<4x256xf32>
    %231 = arith.addf %225, %230 : vector<4x256xf32>
    %232 = vector.extract_strided_slice %0 {offsets = [0, 33], sizes = [4, 1], strides = [1, 1]} : vector<4x36xf32> to vector<4x1xf32>
    %233 = vector.extract_strided_slice %30 {offsets = [3, 0], sizes = [1, 256], strides = [1, 1]} : vector<4x256xf32> to vector<1x256xf32>
    %234 = vector.broadcast %232 : vector<4x1xf32> to vector<4x256xf32>
    %235 = vector.broadcast %233 : vector<1x256xf32> to vector<4x256xf32>
    %236 = arith.mulf %234, %235 : vector<4x256xf32>
    %237 = arith.addf %231, %236 : vector<4x256xf32>
    %238 = vector.extract_strided_slice %0 {offsets = [0, 34], sizes = [4, 1], strides = [1, 1]} : vector<4x36xf32> to vector<4x1xf32>
    %239 = vector.extract_strided_slice %20 {offsets = [3, 0], sizes = [1, 256], strides = [1, 1]} : vector<4x256xf32> to vector<1x256xf32>
    %240 = vector.broadcast %238 : vector<4x1xf32> to vector<4x256xf32>
    %241 = vector.broadcast %239 : vector<1x256xf32> to vector<4x256xf32>
    %242 = arith.mulf %240, %241 : vector<4x256xf32>
    %243 = arith.addf %237, %242 : vector<4x256xf32>
    %244 = vector.extract_strided_slice %0 {offsets = [0, 35], sizes = [4, 1], strides = [1, 1]} : vector<4x36xf32> to vector<4x1xf32>
    %245 = vector.extract_strided_slice %32 {offsets = [3, 0], sizes = [1, 256], strides = [1, 1]} : vector<4x256xf32> to vector<1x256xf32>
    %246 = vector.broadcast %244 : vector<4x1xf32> to vector<4x256xf32>
    %247 = vector.broadcast %245 : vector<1x256xf32> to vector<4x256xf32>
    %248 = arith.mulf %246, %247 : vector<4x256xf32>
    %249 = arith.addf %243, %248 : vector<4x256xf32>
    %250 = vector.broadcast %1 : vector<4x1xf32> to vector<4x256xf32>
    %251 = arith.addf %249, %250 : vector<4x256xf32>
    %cst_17 = arith.constant dense<0.000000e+00> : vector<4xf32>
    %252 = vector.multi_reduction <add>, %251, %cst_17 [1] : vector<4x256xf32> to vector<4xf32>
    %253 = vector.shape_cast %252 : vector<4xf32> to vector<4x1xf32>
    %cst_18 = arith.constant 2.560000e+02 : f32
    %254 = vector.broadcast %cst_18 : f32 to vector<4x1xf32>
    %255 = arith.divf %253, %254 : vector<4x1xf32>
    %256 = vector.broadcast %255 : vector<4x1xf32> to vector<4x256xf32>
    %257 = arith.subf %251, %256 : vector<4x256xf32>
    %258 = arith.mulf %257, %257 : vector<4x256xf32>
    %cst_19 = arith.constant dense<0.000000e+00> : vector<4xf32>
    %259 = vector.multi_reduction <add>, %258, %cst_19 [1] : vector<4x256xf32> to vector<4xf32>
    %260 = vector.shape_cast %259 : vector<4xf32> to vector<4x1xf32>
    %cst_20 = arith.constant 2.560000e+02 : f32
    %261 = vector.broadcast %cst_20 : f32 to vector<4x1xf32>
    %262 = arith.divf %260, %261 : vector<4x1xf32>
    %cst_21 = arith.constant 9.99999974E-6 : f32
    %263 = vector.broadcast %cst_21 : f32 to vector<4x1xf32>
    %264 = arith.addf %262, %263 : vector<4x1xf32>
    %265 = math.rsqrt %264 : vector<4x1xf32>
    %266 = vector.broadcast %265 : vector<4x1xf32> to vector<4x256xf32>
    %267 = arith.mulf %257, %266 : vector<4x256xf32>
    %cst_22 = arith.constant 0.00999999977 : f32
    %268 = vector.broadcast %cst_22 : f32 to vector<4x256xf32>
    %269 = arith.mulf %268, %267 : vector<4x256xf32>
    %270 = arith.maximumf %267, %269 : vector<4x256xf32>
    %c16_i32_23 = arith.constant 16 : i32
    %271 = tpu.dynamic_rotate %270 by %c16_i32_23 dim 1 : vector<4x256xf32>, i32 -> vector<4x256xf32>
    %272 = arith.select %8, %270, %271 : vector<4x256xi1>, vector<4x256xf32>
    %c240_i32_24 = arith.constant 240 : i32
    %273 = tpu.dynamic_rotate %270 by %c240_i32_24 dim 1 : vector<4x256xf32>, i32 -> vector<4x256xf32>
    %274 = arith.select %10, %270, %273 : vector<4x256xi1>, vector<4x256xf32>
    %c1_i32_25 = arith.constant 1 : i32
    %275 = tpu.dynamic_rotate %272 by %c1_i32_25 dim 1 : vector<4x256xf32>, i32 -> vector<4x256xf32>
    %276 = arith.select %12, %272, %275 : vector<4x256xi1>, vector<4x256xf32>
    %c255_i32_26 = arith.constant 255 : i32
    %277 = tpu.dynamic_rotate %272 by %c255_i32_26 dim 1 : vector<4x256xf32>, i32 -> vector<4x256xf32>
    %278 = arith.select %14, %272, %277 : vector<4x256xi1>, vector<4x256xf32>
    %c1_i32_27 = arith.constant 1 : i32
    %279 = tpu.dynamic_rotate %270 by %c1_i32_27 dim 1 : vector<4x256xf32>, i32 -> vector<4x256xf32>
    %280 = arith.select %12, %270, %279 : vector<4x256xi1>, vector<4x256xf32>
    %c255_i32_28 = arith.constant 255 : i32
    %281 = tpu.dynamic_rotate %270 by %c255_i32_28 dim 1 : vector<4x256xf32>, i32 -> vector<4x256xf32>
    %282 = arith.select %14, %270, %281 : vector<4x256xi1>, vector<4x256xf32>
    %c1_i32_29 = arith.constant 1 : i32
    %283 = tpu.dynamic_rotate %274 by %c1_i32_29 dim 1 : vector<4x256xf32>, i32 -> vector<4x256xf32>
    %284 = arith.select %12, %274, %283 : vector<4x256xi1>, vector<4x256xf32>
    %c255_i32_30 = arith.constant 255 : i32
    %285 = tpu.dynamic_rotate %274 by %c255_i32_30 dim 1 : vector<4x256xf32>, i32 -> vector<4x256xf32>
    %286 = arith.select %14, %274, %285 : vector<4x256xi1>, vector<4x256xf32>
    %cst_31 = arith.constant 0.000000e+00 : f32
    %287 = vector.broadcast %cst_31 : f32 to vector<4x256xf32>
    %288 = vector.extract_strided_slice %2 {offsets = [0, 0], sizes = [4, 1], strides = [1, 1]} : vector<4x36xf32> to vector<4x1xf32>
    %289 = vector.extract_strided_slice %276 {offsets = [0, 0], sizes = [1, 256], strides = [1, 1]} : vector<4x256xf32> to vector<1x256xf32>
    %290 = vector.broadcast %288 : vector<4x1xf32> to vector<4x256xf32>
    %291 = vector.broadcast %289 : vector<1x256xf32> to vector<4x256xf32>
    %292 = arith.mulf %290, %291 : vector<4x256xf32>
    %293 = arith.addf %287, %292 : vector<4x256xf32>
    %294 = vector.extract_strided_slice %2 {offsets = [0, 1], sizes = [4, 1], strides = [1, 1]} : vector<4x36xf32> to vector<4x1xf32>
    %295 = vector.extract_strided_slice %272 {offsets = [0, 0], sizes = [1, 256], strides = [1, 1]} : vector<4x256xf32> to vector<1x256xf32>
    %296 = vector.broadcast %294 : vector<4x1xf32> to vector<4x256xf32>
    %297 = vector.broadcast %295 : vector<1x256xf32> to vector<4x256xf32>
    %298 = arith.mulf %296, %297 : vector<4x256xf32>
    %299 = arith.addf %293, %298 : vector<4x256xf32>
    %300 = vector.extract_strided_slice %2 {offsets = [0, 2], sizes = [4, 1], strides = [1, 1]} : vector<4x36xf32> to vector<4x1xf32>
    %301 = vector.extract_strided_slice %278 {offsets = [0, 0], sizes = [1, 256], strides = [1, 1]} : vector<4x256xf32> to vector<1x256xf32>
    %302 = vector.broadcast %300 : vector<4x1xf32> to vector<4x256xf32>
    %303 = vector.broadcast %301 : vector<1x256xf32> to vector<4x256xf32>
    %304 = arith.mulf %302, %303 : vector<4x256xf32>
    %305 = arith.addf %299, %304 : vector<4x256xf32>
    %306 = vector.extract_strided_slice %2 {offsets = [0, 3], sizes = [4, 1], strides = [1, 1]} : vector<4x36xf32> to vector<4x1xf32>
    %307 = vector.extract_strided_slice %280 {offsets = [0, 0], sizes = [1, 256], strides = [1, 1]} : vector<4x256xf32> to vector<1x256xf32>
    %308 = vector.broadcast %306 : vector<4x1xf32> to vector<4x256xf32>
    %309 = vector.broadcast %307 : vector<1x256xf32> to vector<4x256xf32>
    %310 = arith.mulf %308, %309 : vector<4x256xf32>
    %311 = arith.addf %305, %310 : vector<4x256xf32>
    %312 = vector.extract_strided_slice %2 {offsets = [0, 4], sizes = [4, 1], strides = [1, 1]} : vector<4x36xf32> to vector<4x1xf32>
    %313 = vector.extract_strided_slice %270 {offsets = [0, 0], sizes = [1, 256], strides = [1, 1]} : vector<4x256xf32> to vector<1x256xf32>
    %314 = vector.broadcast %312 : vector<4x1xf32> to vector<4x256xf32>
    %315 = vector.broadcast %313 : vector<1x256xf32> to vector<4x256xf32>
    %316 = arith.mulf %314, %315 : vector<4x256xf32>
    %317 = arith.addf %311, %316 : vector<4x256xf32>
    %318 = vector.extract_strided_slice %2 {offsets = [0, 5], sizes = [4, 1], strides = [1, 1]} : vector<4x36xf32> to vector<4x1xf32>
    %319 = vector.extract_strided_slice %282 {offsets = [0, 0], sizes = [1, 256], strides = [1, 1]} : vector<4x256xf32> to vector<1x256xf32>
    %320 = vector.broadcast %318 : vector<4x1xf32> to vector<4x256xf32>
    %321 = vector.broadcast %319 : vector<1x256xf32> to vector<4x256xf32>
    %322 = arith.mulf %320, %321 : vector<4x256xf32>
    %323 = arith.addf %317, %322 : vector<4x256xf32>
    %324 = vector.extract_strided_slice %2 {offsets = [0, 6], sizes = [4, 1], strides = [1, 1]} : vector<4x36xf32> to vector<4x1xf32>
    %325 = vector.extract_strided_slice %284 {offsets = [0, 0], sizes = [1, 256], strides = [1, 1]} : vector<4x256xf32> to vector<1x256xf32>
    %326 = vector.broadcast %324 : vector<4x1xf32> to vector<4x256xf32>
    %327 = vector.broadcast %325 : vector<1x256xf32> to vector<4x256xf32>
    %328 = arith.mulf %326, %327 : vector<4x256xf32>
    %329 = arith.addf %323, %328 : vector<4x256xf32>
    %330 = vector.extract_strided_slice %2 {offsets = [0, 7], sizes = [4, 1], strides = [1, 1]} : vector<4x36xf32> to vector<4x1xf32>
    %331 = vector.extract_strided_slice %274 {offsets = [0, 0], sizes = [1, 256], strides = [1, 1]} : vector<4x256xf32> to vector<1x256xf32>
    %332 = vector.broadcast %330 : vector<4x1xf32> to vector<4x256xf32>
    %333 = vector.broadcast %331 : vector<1x256xf32> to vector<4x256xf32>
    %334 = arith.mulf %332, %333 : vector<4x256xf32>
    %335 = arith.addf %329, %334 : vector<4x256xf32>
    %336 = vector.extract_strided_slice %2 {offsets = [0, 8], sizes = [4, 1], strides = [1, 1]} : vector<4x36xf32> to vector<4x1xf32>
    %337 = vector.extract_strided_slice %286 {offsets = [0, 0], sizes = [1, 256], strides = [1, 1]} : vector<4x256xf32> to vector<1x256xf32>
    %338 = vector.broadcast %336 : vector<4x1xf32> to vector<4x256xf32>
    %339 = vector.broadcast %337 : vector<1x256xf32> to vector<4x256xf32>
    %340 = arith.mulf %338, %339 : vector<4x256xf32>
    %341 = arith.addf %335, %340 : vector<4x256xf32>
    %342 = vector.extract_strided_slice %2 {offsets = [0, 9], sizes = [4, 1], strides = [1, 1]} : vector<4x36xf32> to vector<4x1xf32>
    %343 = vector.extract_strided_slice %276 {offsets = [1, 0], sizes = [1, 256], strides = [1, 1]} : vector<4x256xf32> to vector<1x256xf32>
    %344 = vector.broadcast %342 : vector<4x1xf32> to vector<4x256xf32>
    %345 = vector.broadcast %343 : vector<1x256xf32> to vector<4x256xf32>
    %346 = arith.mulf %344, %345 : vector<4x256xf32>
    %347 = arith.addf %341, %346 : vector<4x256xf32>
    %348 = vector.extract_strided_slice %2 {offsets = [0, 10], sizes = [4, 1], strides = [1, 1]} : vector<4x36xf32> to vector<4x1xf32>
    %349 = vector.extract_strided_slice %272 {offsets = [1, 0], sizes = [1, 256], strides = [1, 1]} : vector<4x256xf32> to vector<1x256xf32>
    %350 = vector.broadcast %348 : vector<4x1xf32> to vector<4x256xf32>
    %351 = vector.broadcast %349 : vector<1x256xf32> to vector<4x256xf32>
    %352 = arith.mulf %350, %351 : vector<4x256xf32>
    %353 = arith.addf %347, %352 : vector<4x256xf32>
    %354 = vector.extract_strided_slice %2 {offsets = [0, 11], sizes = [4, 1], strides = [1, 1]} : vector<4x36xf32> to vector<4x1xf32>
    %355 = vector.extract_strided_slice %278 {offsets = [1, 0], sizes = [1, 256], strides = [1, 1]} : vector<4x256xf32> to vector<1x256xf32>
    %356 = vector.broadcast %354 : vector<4x1xf32> to vector<4x256xf32>
    %357 = vector.broadcast %355 : vector<1x256xf32> to vector<4x256xf32>
    %358 = arith.mulf %356, %357 : vector<4x256xf32>
    %359 = arith.addf %353, %358 : vector<4x256xf32>
    %360 = vector.extract_strided_slice %2 {offsets = [0, 12], sizes = [4, 1], strides = [1, 1]} : vector<4x36xf32> to vector<4x1xf32>
    %361 = vector.extract_strided_slice %280 {offsets = [1, 0], sizes = [1, 256], strides = [1, 1]} : vector<4x256xf32> to vector<1x256xf32>
    %362 = vector.broadcast %360 : vector<4x1xf32> to vector<4x256xf32>
    %363 = vector.broadcast %361 : vector<1x256xf32> to vector<4x256xf32>
    %364 = arith.mulf %362, %363 : vector<4x256xf32>
    %365 = arith.addf %359, %364 : vector<4x256xf32>
    %366 = vector.extract_strided_slice %2 {offsets = [0, 13], sizes = [4, 1], strides = [1, 1]} : vector<4x36xf32> to vector<4x1xf32>
    %367 = vector.extract_strided_slice %270 {offsets = [1, 0], sizes = [1, 256], strides = [1, 1]} : vector<4x256xf32> to vector<1x256xf32>
    %368 = vector.broadcast %366 : vector<4x1xf32> to vector<4x256xf32>
    %369 = vector.broadcast %367 : vector<1x256xf32> to vector<4x256xf32>
    %370 = arith.mulf %368, %369 : vector<4x256xf32>
    %371 = arith.addf %365, %370 : vector<4x256xf32>
    %372 = vector.extract_strided_slice %2 {offsets = [0, 14], sizes = [4, 1], strides = [1, 1]} : vector<4x36xf32> to vector<4x1xf32>
    %373 = vector.extract_strided_slice %282 {offsets = [1, 0], sizes = [1, 256], strides = [1, 1]} : vector<4x256xf32> to vector<1x256xf32>
    %374 = vector.broadcast %372 : vector<4x1xf32> to vector<4x256xf32>
    %375 = vector.broadcast %373 : vector<1x256xf32> to vector<4x256xf32>
    %376 = arith.mulf %374, %375 : vector<4x256xf32>
    %377 = arith.addf %371, %376 : vector<4x256xf32>
    %378 = vector.extract_strided_slice %2 {offsets = [0, 15], sizes = [4, 1], strides = [1, 1]} : vector<4x36xf32> to vector<4x1xf32>
    %379 = vector.extract_strided_slice %284 {offsets = [1, 0], sizes = [1, 256], strides = [1, 1]} : vector<4x256xf32> to vector<1x256xf32>
    %380 = vector.broadcast %378 : vector<4x1xf32> to vector<4x256xf32>
    %381 = vector.broadcast %379 : vector<1x256xf32> to vector<4x256xf32>
    %382 = arith.mulf %380, %381 : vector<4x256xf32>
    %383 = arith.addf %377, %382 : vector<4x256xf32>
    %384 = vector.extract_strided_slice %2 {offsets = [0, 16], sizes = [4, 1], strides = [1, 1]} : vector<4x36xf32> to vector<4x1xf32>
    %385 = vector.extract_strided_slice %274 {offsets = [1, 0], sizes = [1, 256], strides = [1, 1]} : vector<4x256xf32> to vector<1x256xf32>
    %386 = vector.broadcast %384 : vector<4x1xf32> to vector<4x256xf32>
    %387 = vector.broadcast %385 : vector<1x256xf32> to vector<4x256xf32>
    %388 = arith.mulf %386, %387 : vector<4x256xf32>
    %389 = arith.addf %383, %388 : vector<4x256xf32>
    %390 = vector.extract_strided_slice %2 {offsets = [0, 17], sizes = [4, 1], strides = [1, 1]} : vector<4x36xf32> to vector<4x1xf32>
    %391 = vector.extract_strided_slice %286 {offsets = [1, 0], sizes = [1, 256], strides = [1, 1]} : vector<4x256xf32> to vector<1x256xf32>
    %392 = vector.broadcast %390 : vector<4x1xf32> to vector<4x256xf32>
    %393 = vector.broadcast %391 : vector<1x256xf32> to vector<4x256xf32>
    %394 = arith.mulf %392, %393 : vector<4x256xf32>
    %395 = arith.addf %389, %394 : vector<4x256xf32>
    %396 = vector.extract_strided_slice %2 {offsets = [0, 18], sizes = [4, 1], strides = [1, 1]} : vector<4x36xf32> to vector<4x1xf32>
    %397 = vector.extract_strided_slice %276 {offsets = [2, 0], sizes = [1, 256], strides = [1, 1]} : vector<4x256xf32> to vector<1x256xf32>
    %398 = vector.broadcast %396 : vector<4x1xf32> to vector<4x256xf32>
    %399 = vector.broadcast %397 : vector<1x256xf32> to vector<4x256xf32>
    %400 = arith.mulf %398, %399 : vector<4x256xf32>
    %401 = arith.addf %395, %400 : vector<4x256xf32>
    %402 = vector.extract_strided_slice %2 {offsets = [0, 19], sizes = [4, 1], strides = [1, 1]} : vector<4x36xf32> to vector<4x1xf32>
    %403 = vector.extract_strided_slice %272 {offsets = [2, 0], sizes = [1, 256], strides = [1, 1]} : vector<4x256xf32> to vector<1x256xf32>
    %404 = vector.broadcast %402 : vector<4x1xf32> to vector<4x256xf32>
    %405 = vector.broadcast %403 : vector<1x256xf32> to vector<4x256xf32>
    %406 = arith.mulf %404, %405 : vector<4x256xf32>
    %407 = arith.addf %401, %406 : vector<4x256xf32>
    %408 = vector.extract_strided_slice %2 {offsets = [0, 20], sizes = [4, 1], strides = [1, 1]} : vector<4x36xf32> to vector<4x1xf32>
    %409 = vector.extract_strided_slice %278 {offsets = [2, 0], sizes = [1, 256], strides = [1, 1]} : vector<4x256xf32> to vector<1x256xf32>
    %410 = vector.broadcast %408 : vector<4x1xf32> to vector<4x256xf32>
    %411 = vector.broadcast %409 : vector<1x256xf32> to vector<4x256xf32>
    %412 = arith.mulf %410, %411 : vector<4x256xf32>
    %413 = arith.addf %407, %412 : vector<4x256xf32>
    %414 = vector.extract_strided_slice %2 {offsets = [0, 21], sizes = [4, 1], strides = [1, 1]} : vector<4x36xf32> to vector<4x1xf32>
    %415 = vector.extract_strided_slice %280 {offsets = [2, 0], sizes = [1, 256], strides = [1, 1]} : vector<4x256xf32> to vector<1x256xf32>
    %416 = vector.broadcast %414 : vector<4x1xf32> to vector<4x256xf32>
    %417 = vector.broadcast %415 : vector<1x256xf32> to vector<4x256xf32>
    %418 = arith.mulf %416, %417 : vector<4x256xf32>
    %419 = arith.addf %413, %418 : vector<4x256xf32>
    %420 = vector.extract_strided_slice %2 {offsets = [0, 22], sizes = [4, 1], strides = [1, 1]} : vector<4x36xf32> to vector<4x1xf32>
    %421 = vector.extract_strided_slice %270 {offsets = [2, 0], sizes = [1, 256], strides = [1, 1]} : vector<4x256xf32> to vector<1x256xf32>
    %422 = vector.broadcast %420 : vector<4x1xf32> to vector<4x256xf32>
    %423 = vector.broadcast %421 : vector<1x256xf32> to vector<4x256xf32>
    %424 = arith.mulf %422, %423 : vector<4x256xf32>
    %425 = arith.addf %419, %424 : vector<4x256xf32>
    %426 = vector.extract_strided_slice %2 {offsets = [0, 23], sizes = [4, 1], strides = [1, 1]} : vector<4x36xf32> to vector<4x1xf32>
    %427 = vector.extract_strided_slice %282 {offsets = [2, 0], sizes = [1, 256], strides = [1, 1]} : vector<4x256xf32> to vector<1x256xf32>
    %428 = vector.broadcast %426 : vector<4x1xf32> to vector<4x256xf32>
    %429 = vector.broadcast %427 : vector<1x256xf32> to vector<4x256xf32>
    %430 = arith.mulf %428, %429 : vector<4x256xf32>
    %431 = arith.addf %425, %430 : vector<4x256xf32>
    %432 = vector.extract_strided_slice %2 {offsets = [0, 24], sizes = [4, 1], strides = [1, 1]} : vector<4x36xf32> to vector<4x1xf32>
    %433 = vector.extract_strided_slice %284 {offsets = [2, 0], sizes = [1, 256], strides = [1, 1]} : vector<4x256xf32> to vector<1x256xf32>
    %434 = vector.broadcast %432 : vector<4x1xf32> to vector<4x256xf32>
    %435 = vector.broadcast %433 : vector<1x256xf32> to vector<4x256xf32>
    %436 = arith.mulf %434, %435 : vector<4x256xf32>
    %437 = arith.addf %431, %436 : vector<4x256xf32>
    %438 = vector.extract_strided_slice %2 {offsets = [0, 25], sizes = [4, 1], strides = [1, 1]} : vector<4x36xf32> to vector<4x1xf32>
    %439 = vector.extract_strided_slice %274 {offsets = [2, 0], sizes = [1, 256], strides = [1, 1]} : vector<4x256xf32> to vector<1x256xf32>
    %440 = vector.broadcast %438 : vector<4x1xf32> to vector<4x256xf32>
    %441 = vector.broadcast %439 : vector<1x256xf32> to vector<4x256xf32>
    %442 = arith.mulf %440, %441 : vector<4x256xf32>
    %443 = arith.addf %437, %442 : vector<4x256xf32>
    %444 = vector.extract_strided_slice %2 {offsets = [0, 26], sizes = [4, 1], strides = [1, 1]} : vector<4x36xf32> to vector<4x1xf32>
    %445 = vector.extract_strided_slice %286 {offsets = [2, 0], sizes = [1, 256], strides = [1, 1]} : vector<4x256xf32> to vector<1x256xf32>
    %446 = vector.broadcast %444 : vector<4x1xf32> to vector<4x256xf32>
    %447 = vector.broadcast %445 : vector<1x256xf32> to vector<4x256xf32>
    %448 = arith.mulf %446, %447 : vector<4x256xf32>
    %449 = arith.addf %443, %448 : vector<4x256xf32>
    %450 = vector.extract_strided_slice %2 {offsets = [0, 27], sizes = [4, 1], strides = [1, 1]} : vector<4x36xf32> to vector<4x1xf32>
    %451 = vector.extract_strided_slice %276 {offsets = [3, 0], sizes = [1, 256], strides = [1, 1]} : vector<4x256xf32> to vector<1x256xf32>
    %452 = vector.broadcast %450 : vector<4x1xf32> to vector<4x256xf32>
    %453 = vector.broadcast %451 : vector<1x256xf32> to vector<4x256xf32>
    %454 = arith.mulf %452, %453 : vector<4x256xf32>
    %455 = arith.addf %449, %454 : vector<4x256xf32>
    %456 = vector.extract_strided_slice %2 {offsets = [0, 28], sizes = [4, 1], strides = [1, 1]} : vector<4x36xf32> to vector<4x1xf32>
    %457 = vector.extract_strided_slice %272 {offsets = [3, 0], sizes = [1, 256], strides = [1, 1]} : vector<4x256xf32> to vector<1x256xf32>
    %458 = vector.broadcast %456 : vector<4x1xf32> to vector<4x256xf32>
    %459 = vector.broadcast %457 : vector<1x256xf32> to vector<4x256xf32>
    %460 = arith.mulf %458, %459 : vector<4x256xf32>
    %461 = arith.addf %455, %460 : vector<4x256xf32>
    %462 = vector.extract_strided_slice %2 {offsets = [0, 29], sizes = [4, 1], strides = [1, 1]} : vector<4x36xf32> to vector<4x1xf32>
    %463 = vector.extract_strided_slice %278 {offsets = [3, 0], sizes = [1, 256], strides = [1, 1]} : vector<4x256xf32> to vector<1x256xf32>
    %464 = vector.broadcast %462 : vector<4x1xf32> to vector<4x256xf32>
    %465 = vector.broadcast %463 : vector<1x256xf32> to vector<4x256xf32>
    %466 = arith.mulf %464, %465 : vector<4x256xf32>
    %467 = arith.addf %461, %466 : vector<4x256xf32>
    %468 = vector.extract_strided_slice %2 {offsets = [0, 30], sizes = [4, 1], strides = [1, 1]} : vector<4x36xf32> to vector<4x1xf32>
    %469 = vector.extract_strided_slice %280 {offsets = [3, 0], sizes = [1, 256], strides = [1, 1]} : vector<4x256xf32> to vector<1x256xf32>
    %470 = vector.broadcast %468 : vector<4x1xf32> to vector<4x256xf32>
    %471 = vector.broadcast %469 : vector<1x256xf32> to vector<4x256xf32>
    %472 = arith.mulf %470, %471 : vector<4x256xf32>
    %473 = arith.addf %467, %472 : vector<4x256xf32>
    %474 = vector.extract_strided_slice %2 {offsets = [0, 31], sizes = [4, 1], strides = [1, 1]} : vector<4x36xf32> to vector<4x1xf32>
    %475 = vector.extract_strided_slice %270 {offsets = [3, 0], sizes = [1, 256], strides = [1, 1]} : vector<4x256xf32> to vector<1x256xf32>
    %476 = vector.broadcast %474 : vector<4x1xf32> to vector<4x256xf32>
    %477 = vector.broadcast %475 : vector<1x256xf32> to vector<4x256xf32>
    %478 = arith.mulf %476, %477 : vector<4x256xf32>
    %479 = arith.addf %473, %478 : vector<4x256xf32>
    %480 = vector.extract_strided_slice %2 {offsets = [0, 32], sizes = [4, 1], strides = [1, 1]} : vector<4x36xf32> to vector<4x1xf32>
    %481 = vector.extract_strided_slice %282 {offsets = [3, 0], sizes = [1, 256], strides = [1, 1]} : vector<4x256xf32> to vector<1x256xf32>
    %482 = vector.broadcast %480 : vector<4x1xf32> to vector<4x256xf32>
    %483 = vector.broadcast %481 : vector<1x256xf32> to vector<4x256xf32>
    %484 = arith.mulf %482, %483 : vector<4x256xf32>
    %485 = arith.addf %479, %484 : vector<4x256xf32>
    %486 = vector.extract_strided_slice %2 {offsets = [0, 33], sizes = [4, 1], strides = [1, 1]} : vector<4x36xf32> to vector<4x1xf32>
    %487 = vector.extract_strided_slice %284 {offsets = [3, 0], sizes = [1, 256], strides = [1, 1]} : vector<4x256xf32> to vector<1x256xf32>
    %488 = vector.broadcast %486 : vector<4x1xf32> to vector<4x256xf32>
    %489 = vector.broadcast %487 : vector<1x256xf32> to vector<4x256xf32>
    %490 = arith.mulf %488, %489 : vector<4x256xf32>
    %491 = arith.addf %485, %490 : vector<4x256xf32>
    %492 = vector.extract_strided_slice %2 {offsets = [0, 34], sizes = [4, 1], strides = [1, 1]} : vector<4x36xf32> to vector<4x1xf32>
    %493 = vector.extract_strided_slice %274 {offsets = [3, 0], sizes = [1, 256], strides = [1, 1]} : vector<4x256xf32> to vector<1x256xf32>
    %494 = vector.broadcast %492 : vector<4x1xf32> to vector<4x256xf32>
    %495 = vector.broadcast %493 : vector<1x256xf32> to vector<4x256xf32>
    %496 = arith.mulf %494, %495 : vector<4x256xf32>
    %497 = arith.addf %491, %496 : vector<4x256xf32>
    %498 = vector.extract_strided_slice %2 {offsets = [0, 35], sizes = [4, 1], strides = [1, 1]} : vector<4x36xf32> to vector<4x1xf32>
    %499 = vector.extract_strided_slice %286 {offsets = [3, 0], sizes = [1, 256], strides = [1, 1]} : vector<4x256xf32> to vector<1x256xf32>
    %500 = vector.broadcast %498 : vector<4x1xf32> to vector<4x256xf32>
    %501 = vector.broadcast %499 : vector<1x256xf32> to vector<4x256xf32>
    %502 = arith.mulf %500, %501 : vector<4x256xf32>
    %503 = arith.addf %497, %502 : vector<4x256xf32>
    %504 = vector.broadcast %3 : vector<4x1xf32> to vector<4x256xf32>
    %505 = arith.addf %503, %504 : vector<4x256xf32>
    %cst_32 = arith.constant dense<0.000000e+00> : vector<4xf32>
    %506 = vector.multi_reduction <add>, %505, %cst_32 [1] : vector<4x256xf32> to vector<4xf32>
    %507 = vector.shape_cast %506 : vector<4xf32> to vector<4x1xf32>
    %cst_33 = arith.constant 2.560000e+02 : f32
    %508 = vector.broadcast %cst_33 : f32 to vector<4x1xf32>
    %509 = arith.divf %507, %508 : vector<4x1xf32>
    %510 = vector.broadcast %509 : vector<4x1xf32> to vector<4x256xf32>
    %511 = arith.subf %505, %510 : vector<4x256xf32>
    %512 = arith.mulf %511, %511 : vector<4x256xf32>
    %cst_34 = arith.constant dense<0.000000e+00> : vector<4xf32>
    %513 = vector.multi_reduction <add>, %512, %cst_34 [1] : vector<4x256xf32> to vector<4xf32>
    %514 = vector.shape_cast %513 : vector<4xf32> to vector<4x1xf32>
    %cst_35 = arith.constant 2.560000e+02 : f32
    %515 = vector.broadcast %cst_35 : f32 to vector<4x1xf32>
    %516 = arith.divf %514, %515 : vector<4x1xf32>
    %cst_36 = arith.constant 9.99999974E-6 : f32
    %517 = vector.broadcast %cst_36 : f32 to vector<4x1xf32>
    %518 = arith.addf %516, %517 : vector<4x1xf32>
    %519 = math.rsqrt %518 : vector<4x1xf32>
    %520 = vector.broadcast %519 : vector<4x1xf32> to vector<4x256xf32>
    %521 = arith.mulf %511, %520 : vector<4x256xf32>
    %c0_37 = arith.constant 0 : index
    %c0_38 = arith.constant 0 : index
    %c0_39 = arith.constant 0 : index
    %522 = vector.load %arg1[%c0_37, %c0_38, %c0_39] : memref<1x4x256xf32, #tpu.memory_space<vmem>>, vector<1x4x256xf32>
    %523 = vector.shape_cast %522 : vector<1x4x256xf32> to vector<4x256xf32>
    %524 = arith.addf %523, %521 : vector<4x256xf32>
    %cst_40 = arith.constant 0.709219872 : f32
    %525 = vector.broadcast %cst_40 : f32 to vector<4x256xf32>
    %526 = arith.mulf %524, %525 : vector<4x256xf32>
    %c0_41 = arith.constant 0 : index
    %c0_42 = arith.constant 0 : index
    %c0_43 = arith.constant 0 : index
    %527 = vector.load %arg6[%c0_41, %c0_42, %c0_43] : memref<1x4x256xf32, #tpu.memory_space<vmem>>, vector<1x4x256xf32>
    %528 = vector.shape_cast %527 : vector<1x4x256xf32> to vector<4x256xf32>
    %529 = vector.shape_cast %526 : vector<4x256xf32> to vector<1x4x256xf32>
    tpu.vector_store %arg6[%c0_41, %c0_42, %c0_43], %529 {strides = array<i32>} : memref<1x4x256xf32, #tpu.memory_space<vmem>>, vector<1x4x256xf32>,
    return
  }
  func.func @transform_0(%arg0: i32) -> (i32, i32, i32) {
    %c0_i32 = arith.constant 0 : i32
    %c0_i32_0 = arith.constant 0 : i32
    %c0_i32_1 = arith.constant 0 : i32
    return %arg0, %c0_i32, %c0_i32_0 : i32, i32, i32
  }
  func.func @transform_1(%arg0: i32) -> (i32, i32) {
    %c0_i32 = arith.constant 0 : i32
    %c0_i32_0 = arith.constant 0 : i32
    %c0_i32_1 = arith.constant 0 : i32
    return %c0_i32, %c0_i32_0 : i32, i32
  }
  func.func @transform_2(%arg0: i32) -> (i32, i32) {
    %c0_i32 = arith.constant 0 : i32
    %c0_i32_0 = arith.constant 0 : i32
    %c0_i32_1 = arith.constant 0 : i32
    return %c0_i32, %c0_i32_0 : i32, i32
  }
  func.func @transform_3(%arg0: i32) -> (i32, i32) {
    %c0_i32 = arith.constant 0 : i32
    %c0_i32_0 = arith.constant 0 : i32
    %c0_i32_1 = arith.constant 0 : i32
    return %c0_i32, %c0_i32_0 : i32, i32
  }
  func.func @transform_4(%arg0: i32) -> (i32, i32) {
    %c0_i32 = arith.constant 0 : i32
    %c0_i32_0 = arith.constant 0 : i32
    %c0_i32_1 = arith.constant 0 : i32
    return %c0_i32, %c0_i32_0 : i32, i32
  }
  func.func @transform_5(%arg0: i32) -> (i32, i32, i32) {
    %c0_i32 = arith.constant 0 : i32
    %c0_i32_0 = arith.constant 0 : i32
    %c0_i32_1 = arith.constant 0 : i32
    return %arg0, %c0_i32, %c0_i32_0 : i32, i32, i32
  }
}

</mosaic_0001>

<llo_original>
// kernel: res_block_forward.1
$region0: #{res_block_forward.1}
  #allocation0 [shape = 'u32[]', space=smem, size = 0x4, offset = 0x4, fixed_abs, tag = 'smem constant byte address 0x4 - core index']
  #allocation1 [shape = 'u32[72,128]{1,0:T(1,128)}', space=vmem, size = 0x9000, scoped, tag = 'internal scratch']
  %s0 = inlined_call_operand.vmem [shape: f32[2,4,256], index: 0, kind: input, shape index: {}]
  %s1 = inlined_call_operand.vmem [shape: f32[4,36], index: 1, kind: input, shape index: {}]
  %s2 = inlined_call_operand.vmem [shape: f32[4,1], index: 2, kind: input, shape index: {}]
  %s3 = inlined_call_operand.vmem [shape: f32[4,36], index: 3, kind: input, shape index: {}]
  %s4 = inlined_call_operand.vmem [shape: f32[4,1], index: 4, kind: input, shape index: {}]
  %s5 = inlined_call_operand.vmem [shape: f32[2,4,256], index: 5, kind: output, shape index: {}]
  %s6 = sld [smem:[#allocation0]]
  $region53: #{res_block_forward.1} parent=0
    _
  %s8 = ssub.s32 1, %s6
  %s9 = scalar_select 0, %s8, %s6
  loop: start=0, step=1, limit=4
  $region2: #{res_block_forward.1} parent=0 // loop_pre_header
    _
  $region3: #{res_block_forward.1} parent=0 // loop_header
    %s11 = sphi 0, %s15
    %p12 = scmp.ge.s32.totalorder %s11, 4
    %s21 = sphi 0, %s23
    %s24 = sphi 0, %s21
    %s25 = sphi 0, %s24
    %s41 = sphi 0, %s25
    %s45 = sphi 0, %s45
    %s47 = sphi 0, %s45
    %s48 = sphi 0, %s47
    %s62 = sphi 0, %s48
    %s66 = sphi 0, %s66
    %s68 = sphi 0, %s66
    %s69 = sphi 0, %s68
    %s83 = sphi 0, %s69
    %s87 = sphi 0, %s87
    %s89 = sphi 0, %s87
    %s90 = sphi 0, %s89
    %s104 = sphi 0, %s90
    %s108 = sphi 0, %s108
    %s110 = sphi 0, %s108
    %s111 = sphi 0, %s110
    %s125 = sphi 0, %s111
    %s131 = sphi 0, %s133
    %s134 = sphi 0, %s131
    %s135 = sphi 0, %s134
    %s151 = sphi 0, %s135
  $region4: #{res_block_forward.1} parent=0 // loop_header_branch
    %14 = sbr.rel (%p12) target = $region8
  $region5: #{res_block_forward.1} parent=0 // loop_body
    %s16 = ssub.s32 %s11, 1
    %s17 = ssub.s32 %s11, 2
    %s18 = sadd.s32 %s11, 1
    %s19 = ssub.s32 %s11, %s18
    %p20 = scmp.eq.s32.totalorder %s19, 0
    %s22 = sadd.s32 %s21, 1
    %s23 = scalar_select %p20, %s21, %s22
    %p26 = pneg %p20
    %p27 = scmp.eq.s32.totalorder %s11, 1
    %p28 = por %p26, %p27
    %p29 = scmp.ne.s32.totalorder %s21, %s24
    %p30 = scmp.eq.s32.totalorder %s11, 0
    %p31 = por %p29, %p30
    %p32 = scmp.ne.s32.totalorder %s21, %s24
    %p33 = scmp.eq.s32.totalorder %s16, 1
    %p34 = por %p32, %p33
    %p35 = scmp.ne.s32.totalorder %s24, %s25
    %p36 = scmp.eq.s32.totalorder %s16, 0
    %p37 = por %p35, %p36
    %p38 = scmp.ne.s32.totalorder %s24, %s25
    %p39 = scmp.eq.s32.totalorder %s17, 1
    %p40 = por %p38, %p39
    %p42 = scmp.ne.s32.totalorder %s25, %s41
    %p43 = scmp.eq.s32.totalorder %s17, 0
    %p44 = por %p42, %p43
    %s46 = sadd.s32 %s45, 1
    %p49 = scmp.eq.s32.totalorder %s11, 1
    %p50 = scmp.ne.s32.totalorder %s45, %s47
    %p51 = scmp.eq.s32.totalorder %s11, 0
    %p52 = por %p50, %p51
    %p53 = scmp.ne.s32.totalorder %s45, %s47
    %p54 = scmp.eq.s32.totalorder %s16, 1
    %p55 = por %p53, %p54
    %p56 = scmp.ne.s32.totalorder %s47, %s48
    %p57 = scmp.eq.s32.totalorder %s16, 0
    %p58 = por %p56, %p57
    %p59 = scmp.ne.s32.totalorder %s47, %s48
    %p60 = scmp.eq.s32.totalorder %s17, 1
    %p61 = por %p59, %p60
    %p63 = scmp.ne.s32.totalorder %s48, %s62
    %p64 = scmp.eq.s32.totalorder %s17, 0
    %p65 = por %p63, %p64
    %s67 = sadd.s32 %s66, 1
    %p70 = scmp.eq.s32.totalorder %s11, 1
    %p71 = scmp.ne.s32.totalorder %s66, %s68
    %p72 = scmp.eq.s32.totalorder %s11, 0
    %p73 = por %p71, %p72
    %p74 = scmp.ne.s32.totalorder %s66, %s68
    %p75 = scmp.eq.s32.totalorder %s16, 1
    %p76 = por %p74, %p75
    %p77 = scmp.ne.s32.totalorder %s68, %s69
    %p78 = scmp.eq.s32.totalorder %s16, 0
    %p79 = por %p77, %p78
    %p80 = scmp.ne.s32.totalorder %s68, %s69
    %p81 = scmp.eq.s32.totalorder %s17, 1
    %p82 = por %p80, %p81
    %p84 = scmp.ne.s32.totalorder %s69, %s83
    %p85 = scmp.eq.s32.totalorder %s17, 0
    %p86 = por %p84, %p85
    %s88 = sadd.s32 %s87, 1
    %p91 = scmp.eq.s32.totalorder %s11, 1
    %p92 = scmp.ne.s32.totalorder %s87, %s89
    %p93 = scmp.eq.s32.totalorder %s11, 0
    %p94 = por %p92, %p93
    %p95 = scmp.ne.s32.totalorder %s87, %s89
    %p96 = scmp.eq.s32.totalorder %s16, 1
    %p97 = por %p95, %p96
    %p98 = scmp.ne.s32.totalorder %s89, %s90
    %p99 = scmp.eq.s32.totalorder %s16, 0
    %p100 = por %p98, %p99
    %p101 = scmp.ne.s32.totalorder %s89, %s90
    %p102 = scmp.eq.s32.totalorder %s17, 1
    %p103 = por %p101, %p102
    %p105 = scmp.ne.s32.totalorder %s90, %s104
    %p106 = scmp.eq.s32.totalorder %s17, 0
    %p107 = por %p105, %p106
    %s109 = sadd.s32 %s108, 1
    %p112 = scmp.eq.s32.totalorder %s11, 1
    %p113 = scmp.ne.s32.totalorder %s108, %s110
    %p114 = scmp.eq.s32.totalorder %s11, 0
    %p115 = por %p113, %p114
    %p116 = scmp.ne.s32.totalorder %s108, %s110
    %p117 = scmp.eq.s32.totalorder %s16, 1
    %p118 = por %p116, %p117
    %p119 = scmp.ne.s32.totalorder %s110, %s111
    %p120 = scmp.eq.s32.totalorder %s16, 0
    %p121 = por %p119, %p120
    %p122 = scmp.ne.s32.totalorder %s110, %s111
    %p123 = scmp.eq.s32.totalorder %s17, 1
    %p124 = por %p122, %p123
    %p126 = scmp.ne.s32.totalorder %s111, %s125
    %p127 = scmp.eq.s32.totalorder %s17, 0
    %p128 = por %p126, %p127
    %s129 = ssub.s32 %s11, %s18
    %p130 = scmp.eq.s32.totalorder %s129, 0
    %s132 = sadd.s32 %s131, 1
    %s133 = scalar_select %p130, %s131, %s132
    %p136 = pneg %p130
    %p137 = scmp.eq.s32.totalorder %s11, 1
    %p138 = por %p136, %p137
    %p139 = scmp.ne.s32.totalorder %s131, %s134
    %p140 = scmp.eq.s32.totalorder %s11, 0
    %p141 = por %p139, %p140
    %p142 = scmp.ne.s32.totalorder %s131, %s134
    %p143 = scmp.eq.s32.totalorder %s16, 1
    %p144 = por %p142, %p143
    %p145 = scmp.ne.s32.totalorder %s134, %s135
    %p146 = scmp.eq.s32.totalorder %s16, 0
    %p147 = por %p145, %p146
    %p148 = scmp.ne.s32.totalorder %s134, %s135
    %p149 = scmp.eq.s32.totalorder %s17, 1
    %p150 = por %p148, %p149
    %p152 = scmp.ne.s32.totalorder %s135, %s151
    %p153 = scmp.eq.s32.totalorder %s17, 0
    %p154 = por %p152, %p153
    %p155 = scmp.le.s32.totalorder 1, %s11
    %p156 = scmp.lt.s32.totalorder %s11, 3
    %p157 = pnand %p155, %p156
    %p158 = pneg %p157
    // Predicated region
    $region9: #{res_block_forward.1} parent=5 // pred_check
      _
    $region10: #{res_block_forward.1} parent=5 // pred_check_branch
      %160 = sbr.rel (%p157) target = $region12
    $region11: #{res_block_forward.1} parent=5 // pred_region
      %s161 = ssub.s32 %s11, 1
      // Predicated region
      $region13: #{res_block_forward.1} parent=11 // pred_check
        %p162 = pneg %p58
      $region14: #{res_block_forward.1} parent=11 // pred_check_branch
        %164 = sbr.rel (%p162) target = $region16
      $region15: #{res_block_forward.1} parent=11 // pred_region
        _
      $region16: #{res_block_forward.1} parent=11 // pred_fallthru
        _
      // Predicated region
      $region17: #{res_block_forward.1} parent=11 // pred_check
        %p165 = pneg %p79
      $region18: #{res_block_forward.1} parent=11 // pred_check_branch
        %167 = sbr.rel (%p165) target = $region20
      $region19: #{res_block_forward.1} parent=11 // pred_region
        _
      $region20: #{res_block_forward.1} parent=11 // pred_fallthru
        _
      // Predicated region
      $region21: #{res_block_forward.1} parent=11 // pred_check
        %p168 = pneg %p100
      $region22: #{res_block_forward.1} parent=11 // pred_check_branch
        %170 = sbr.rel (%p168) target = $region24
      $region23: #{res_block_forward.1} parent=11 // pred_region
        _
      $region24: #{res_block_forward.1} parent=11 // pred_fallthru
        _
      // Predicated region
      $region25: #{res_block_forward.1} parent=11 // pred_check
        %p171 = pneg %p121
      $region26: #{res_block_forward.1} parent=11 // pred_check_branch
        %173 = sbr.rel (%p171) target = $region28
      $region27: #{res_block_forward.1} parent=11 // pred_region
        _
      $region28: #{res_block_forward.1} parent=11 // pred_fallthru
        _
    $region12: #{res_block_forward.1} parent=5 // pred_fallthru
      _
    %p174 = scmp.lt.s32.totalorder %s11, 2
    // Predicated region
    $region29: #{res_block_forward.1} parent=5 // pred_check
      %p175 = pneg %p174
    $region30: #{res_block_forward.1} parent=5 // pred_check_branch
      %177 = sbr.rel (%p175) target = $region32
    $region31: #{res_block_forward.1} parent=5 // pred_region
      // Predicated region
      $region33: #{res_block_forward.1} parent=31 // pred_check
        %p178 = pneg %p31
      $region34: #{res_block_forward.1} parent=31 // pred_check_branch
        %180 = sbr.rel (%p178) target = $region36
      $region35: #{res_block_forward.1} parent=31 // pred_region
        %p181 = scmp.lt.s32.totalorder %s11, 1
        %s182 = scalar_select %p181, %s11, 1
        %s183 = smul.addr %s182, 2
        %s184 = smul.addr %s183, 4
        %s185 = scalar_lea.vmem %s0, %s184
      $region36: #{res_block_forward.1} parent=31 // pred_fallthru
        _
    $region32: #{res_block_forward.1} parent=5 // pred_fallthru
      _
    %p186 = scmp.le.s32.totalorder 1, %s11
    %p187 = scmp.lt.s32.totalorder %s11, 3
    %p188 = pnand %p186, %p187
    %p189 = pneg %p188
    // Predicated region
    $region37: #{res_block_forward.1} parent=5 // pred_check
      _
    $region38: #{res_block_forward.1} parent=5 // pred_check_branch
      %191 = sbr.rel (%p188) target = $region40
    $region39: #{res_block_forward.1} parent=5 // pred_region
      %s192 = ssub.s32 %s11, 1
      %p193 = scmp.lt.s32.totalorder %s16, 1
      %s194 = scalar_select %p193, %s16, 1
      %s195 = smul.addr %s194, 2
      %s196 = smul.addr %s195, 4
      %s197 = scalar_lea.vmem %s0, %s196
      %p198 = pneg %p37
      %p199 = pneg %p34
      %p200 = pneg %p58
      %p201 = pneg %p55
      %p202 = pneg %p79
      %p203 = pneg %p76
      %p204 = pneg %p100
      %p205 = pneg %p97
      %p206 = pneg %p121
      %p207 = pneg %p118
      %p208 = pneg %p147
      %p209 = pneg %p144
      %p210 = scmp.lt.s32.totalorder %s16, 1
      %s211 = scalar_select %p210, %s16, 1
      %s212 = smul.addr %s211, 2
      %s213 = smul.addr %s212, 4
      %s214 = scalar_lea.vmem %s5, %s213
      %p215 = scmp.lt.s32.totalorder %s16, 1
      %s216 = scalar_select %p215, %s16, 1
      %s217 = smul.addr %s216, 2
      %s218 = smul.addr %s217, 4
      %s219 = scalar_lea.vmem %s0, %s218
      %p220 = scmp.lt.s32.totalorder %s16, 1
      %s221 = scalar_select %p220, %s16, 1
      %s222 = smul.addr %s221, 2
      %s223 = smul.addr %s222, 4
      %s224 = scalar_lea.vmem %s5, %s223
      %v225 = vld [vmem:[%s1] sm:$0xf]
      %v226 = vld [vmem:[%s2] sm:$0xf]
      %v227 = vld [vmem:[%s3] sm:$0xf]
      %v228 = vld [vmem:[%s4] sm:$0xf]
      %v229 = vlaneseq
      %v230 = vand.u32 %v229, 127
      %v231 = vadd.s32 %v230, 128
      %v232 = vand.u32 %v230, 15
      %v233 = vand.u32 %v231, 15
      %vm234 = vcmp.lt.s32.totalorder %v230, 16
      %vm235 = vcmp.lt.s32.totalorder %v231, 16
      %vm236 = vcmp.ge.s32.totalorder %v230, 240
      %vm237 = vcmp.ge.s32.totalorder %v231, 240
      %vm238 = vcmp.eq.s32.totalorder %v232, 0
      %vm239 = vcmp.eq.s32.totalorder %v233, 0
      %vm240 = vcmp.eq.s32.totalorder %v232, 15
      %vm241 = vcmp.eq.s32.totalorder %v233, 15
      %v242 = vld [vmem:[%s219] sm:$0xff]
      %244 = vst [vmem:[#allocation1] ss:$2 sm:$0xff] %v242
      %v245 = vld.sshfl [vmem:[#allocation1] sm:$0xff pattern:$0x75316420]
      %v246 = vld.sshfl [vmem:[#allocation1 + $0x8] sm:$0xff pattern:$0x75316420]
      %249 = vrot.lane.b32.xlu0 %v245, 16
      %v250 = vpop.permute.xlu0 %249
      %251 = vrot.lane.b32.xlu0 %v246, 16
      %v252 = vpop.permute.xlu0 %251
      %v253 = vsel %vm234, %v250, %v252
      %v254 = vsel %vm234, %v252, %v250
      %255 = vst [vmem:[#allocation1] ss:$2 sm:$0xff] %v242
      %v256 = vld.sshfl [vmem:[#allocation1] sm:$0xff pattern:$0x75316420]
      %v257 = vld.sshfl [vmem:[#allocation1 + $0x8] sm:$0xff pattern:$0x75316420]
      %v260 = vsel %vm234, %v256, %v254
      %v261 = vsel %vm235, %v257, %v253
      %262 = vst [vmem:[#allocation1] ss:$2 sm:$0xff] %v242
      %v263 = vld.sshfl [vmem:[#allocation1] sm:$0xff pattern:$0x75316420]
      %v264 = vld.sshfl [vmem:[#allocation1 + $0x8] sm:$0xff pattern:$0x75316420]
      %267 = vrot.lane.b32.xlu0 %v263, 112
      %v268 = vpop.permute.xlu0 %267
      %269 = vrot.lane.b32.xlu0 %v264, 112
      %v270 = vpop.permute.xlu0 %269
      %vm271 = vcmp.lt.s32.totalorder %v230, 112
      %v272 = vsel %vm271, %v268, %v270
      %v273 = vsel %vm271, %v270, %v268
      %274 = vst [vmem:[#allocation1] ss:$2 sm:$0xff] %v242
      %v275 = vld.sshfl [vmem:[#allocation1] sm:$0xff pattern:$0x75316420]
      %v276 = vld.sshfl [vmem:[#allocation1 + $0x8] sm:$0xff pattern:$0x75316420]
      %v279 = vsel %vm236, %v275, %v272
      %v280 = vsel %vm237, %v276, %v273
      %281 = vrot.lane.b32.xlu0 %v260, 1
      %v282 = vpop.permute.xlu0 %281
      %283 = vrot.lane.b32.xlu0 %v261, 1
      %v284 = vpop.permute.xlu0 %283
      %vm285 = vcmp.lt.s32.totalorder %v230, 1
      %v286 = vsel %vm285, %v282, %v284
      %v287 = vsel %vm285, %v284, %v282
      %v288 = vsel %vm238, %v260, %v287
      %v289 = vsel %vm239, %v261, %v286
      %290 = vrot.lane.b32.xlu0 %v260, 127
      %v291 = vpop.permute.xlu0 %290
      %292 = vrot.lane.b32.xlu0 %v261, 127
      %v293 = vpop.permute.xlu0 %292
      %vm294 = vcmp.lt.s32.totalorder %v230, 127
      %v295 = vsel %vm294, %v291, %v293
      %v296 = vsel %vm294, %v293, %v291
      %v297 = vsel %vm240, %v260, %v295
      %v298 = vsel %vm241, %v261, %v296
      %299 = vst [vmem:[#allocation1] ss:$2 sm:$0xff] %v242
      %v300 = vld.sshfl [vmem:[#allocation1] sm:$0xff pattern:$0x75316420]
      %v301 = vld.sshfl [vmem:[#allocation1 + $0x8] sm:$0xff pattern:$0x75316420]
      %304 = vrot.lane.b32.xlu0 %v300, 1
      %v305 = vpop.permute.xlu0 %304
      %306 = vrot.lane.b32.xlu0 %v301, 1
      %v307 = vpop.permute.xlu0 %306
      %v308 = vsel %vm285, %v305, %v307
      %v309 = vsel %vm285, %v307, %v305
      %310 = vst [vmem:[#allocation1] ss:$2 sm:$0xff] %v242
      %v311 = vld.sshfl [vmem:[#allocation1] sm:$0xff pattern:$0x75316420]
      %v312 = vld.sshfl [vmem:[#allocation1 + $0x8] sm:$0xff pattern:$0x75316420]
      %v315 = vsel %vm238, %v311, %v309
      %v316 = vsel %vm239, %v312, %v308
      %317 = vst [vmem:[#allocation1] ss:$2 sm:$0xff] %v242
      %v318 = vld.sshfl [vmem:[#allocation1] sm:$0xff pattern:$0x75316420]
      %v319 = vld.sshfl [vmem:[#allocation1 + $0x8] sm:$0xff pattern:$0x75316420]
      %322 = vrot.lane.b32.xlu0 %v318, 127
      %v323 = vpop.permute.xlu0 %322
      %324 = vrot.lane.b32.xlu0 %v319, 127
      %v325 = vpop.permute.xlu0 %324
      %v326 = vsel %vm294, %v323, %v325
      %v327 = vsel %vm294, %v325, %v323
      %328 = vst [vmem:[#allocation1] ss:$2 sm:$0xff] %v242
      %v329 = vld.sshfl [vmem:[#allocation1] sm:$0xff pattern:$0x75316420]
      %v330 = vld.sshfl [vmem:[#allocation1 + $0x8] sm:$0xff pattern:$0x75316420]
      %v333 = vsel %vm240, %v329, %v326
      %v334 = vsel %vm241, %v330, %v327
      %335 = vrot.lane.b32.xlu0 %v279, 1
      %v336 = vpop.permute.xlu0 %335
      %337 = vrot.lane.b32.xlu0 %v280, 1
      %v338 = vpop.permute.xlu0 %337
      %v339 = vsel %vm285, %v336, %v338
      %v340 = vsel %vm285, %v338, %v336
      %v341 = vsel %vm238, %v279, %v340
      %v342 = vsel %vm239, %v280, %v339
      %343 = vrot.lane.b32.xlu0 %v279, 127
      %v344 = vpop.permute.xlu0 %343
      %345 = vrot.lane.b32.xlu0 %v280, 127
      %v346 = vpop.permute.xlu0 %345
      %v347 = vsel %vm294, %v344, %v346
      %v348 = vsel %vm294, %v346, %v344
      %v349 = vsel %vm240, %v279, %v347
      %v350 = vsel %vm241, %v280, %v348
      %352 = vset.pattern.permute.xlu0 0
      %353 = vperm.xlu0 %352, %v225
      %v354 = vpop.permute.xlu0 %353
      %v356 = vperm.slane %v288, 0
      %v357 = vperm.slane %v289, 0
      %v358 = vmul.f32 %v354, %v356
      %v359 = vmul.f32 %v354, %v357
      %v360 = vadd.f32 %v358, 0.0
      %v361 = vadd.f32 %v359, 0.0
      %362 = vset.pattern.permute.xlu0 1
      %363 = vperm.xlu0 %362, %v225
      %v364 = vpop.permute.xlu0 %363
      %v366 = vperm.slane %v260, 0
      %v367 = vperm.slane %v261, 0
      %v368 = vmul.f32 %v364, %v366
      %v369 = vmul.f32 %v364, %v367
      %v370 = vadd.f32 %v360, %v368
      %v371 = vadd.f32 %v361, %v369
      %372 = vset.pattern.permute.xlu0 2
      %373 = vperm.xlu0 %372, %v225
      %v374 = vpop.permute.xlu0 %373
      %v376 = vperm.slane %v297, 0
      %v377 = vperm.slane %v298, 0
      %v378 = vmul.f32 %v374, %v376
      %v379 = vmul.f32 %v374, %v377
      %v380 = vadd.f32 %v370, %v378
      %v381 = vadd.f32 %v371, %v379
      %382 = vset.pattern.permute.xlu0 3
      %383 = vperm.xlu0 %382, %v225
      %v384 = vpop.permute.xlu0 %383
      %v386 = vperm.slane %v315, 0
      %v387 = vperm.slane %v316, 0
      %v388 = vmul.f32 %v384, %v386
      %v389 = vmul.f32 %v384, %v387
      %v390 = vadd.f32 %v380, %v388
      %v391 = vadd.f32 %v381, %v389
      %392 = vset.pattern.permute.xlu0 4
      %393 = vperm.xlu0 %392, %v225
      %v394 = vpop.permute.xlu0 %393
      %v396 = vperm.slane %v242, 0
      %v397 = vperm.slane %v242, 4
      %v400 = vperm.slane %v396, 0
      %v401 = vperm.slane %v397, 0
      %v402 = vmul.f32 %v394, %v400
      %v403 = vmul.f32 %v394, %v401
      %v404 = vadd.f32 %v390, %v402
      %v405 = vadd.f32 %v391, %v403
      %406 = vset.pattern.permute.xlu0 5
      %407 = vperm.xlu0 %406, %v225
      %v408 = vpop.permute.xlu0 %407
      %v410 = vperm.slane %v333, 0
      %v411 = vperm.slane %v334, 0
      %v412 = vmul.f32 %v408, %v410
      %v413 = vmul.f32 %v408, %v411
      %v414 = vadd.f32 %v404, %v412
      %v415 = vadd.f32 %v405, %v413
      %416 = vset.pattern.permute.xlu0 6
      %417 = vperm.xlu0 %416, %v225
      %v418 = vpop.permute.xlu0 %417
      %v420 = vperm.slane %v341, 0
      %v421 = vperm.slane %v342, 0
      %v422 = vmul.f32 %v418, %v420
      %v423 = vmul.f32 %v418, %v421
      %v424 = vadd.f32 %v414, %v422
      %v425 = vadd.f32 %v415, %v423
      %426 = vset.pattern.permute.xlu0 7
      %427 = vperm.xlu0 %426, %v225
      %v428 = vpop.permute.xlu0 %427
      %v430 = vperm.slane %v279, 0
      %v431 = vperm.slane %v280, 0
      %v432 = vmul.f32 %v428, %v430
      %v433 = vmul.f32 %v428, %v431
      %v434 = vadd.f32 %v424, %v432
      %v435 = vadd.f32 %v425, %v433
      %436 = vset.pattern.permute.xlu0 8
      %437 = vperm.xlu0 %436, %v225
      %v438 = vpop.permute.xlu0 %437
      %v440 = vperm.slane %v349, 0
      %v441 = vperm.slane %v350, 0
      %v442 = vmul.f32 %v438, %v440
      %v443 = vmul.f32 %v438, %v441
      %v444 = vadd.f32 %v434, %v442
      %v445 = vadd.f32 %v435, %v443
      %446 = vset.pattern.permute.xlu0 9
      %447 = vperm.xlu0 %446, %v225
      %v448 = vpop.permute.xlu0 %447
      %v450 = vperm.slane %v288, 1
      %v451 = vperm.slane %v289, 1
      %v452 = vmul.f32 %v448, %v450
      %v453 = vmul.f32 %v448, %v451
      %v454 = vadd.f32 %v444, %v452
      %v455 = vadd.f32 %v445, %v453
      %456 = vset.pattern.permute.xlu0 10
      %457 = vperm.xlu0 %456, %v225
      %v458 = vpop.permute.xlu0 %457
      %v460 = vperm.slane %v260, 1
      %v461 = vperm.slane %v261, 1
      %v462 = vmul.f32 %v458, %v460
      %v463 = vmul.f32 %v458, %v461
      %v464 = vadd.f32 %v454, %v462
      %v465 = vadd.f32 %v455, %v463
      %466 = vset.pattern.permute.xlu0 11
      %467 = vperm.xlu0 %466, %v225
      %v468 = vpop.permute.xlu0 %467
      %v470 = vperm.slane %v297, 1
      %v471 = vperm.slane %v298, 1
      %v472 = vmul.f32 %v468, %v470
      %v473 = vmul.f32 %v468, %v471
      %v474 = vadd.f32 %v464, %v472
      %v475 = vadd.f32 %v465, %v473
      %476 = vset.pattern.permute.xlu0 12
      %477 = vperm.xlu0 %476, %v225
      %v478 = vpop.permute.xlu0 %477
      %v480 = vperm.slane %v315, 1
      %v481 = vperm.slane %v316, 1
      %v482 = vmul.f32 %v478, %v480
      %v483 = vmul.f32 %v478, %v481
      %v484 = vadd.f32 %v474, %v482
      %v485 = vadd.f32 %v475, %v483
      %486 = vset.pattern.permute.xlu0 13
      %487 = vperm.xlu0 %486, %v225
      %v488 = vpop.permute.xlu0 %487
      %v490 = vperm.slane %v242, 1
      %v491 = vperm.slane %v242, 5
      %v494 = vperm.slane %v490, 1
      %v495 = vperm.slane %v491, 1
      %v496 = vmul.f32 %v488, %v494
      %v497 = vmul.f32 %v488, %v495
      %v498 = vadd.f32 %v484, %v496
      %v499 = vadd.f32 %v485, %v497
      %500 = vset.pattern.permute.xlu0 14
      %501 = vperm.xlu0 %500, %v225
      %v502 = vpop.permute.xlu0 %501
      %v504 = vperm.slane %v333, 1
      %v505 = vperm.slane %v334, 1
      %v506 = vmul.f32 %v502, %v504
      %v507 = vmul.f32 %v502, %v505
      %v508 = vadd.f32 %v498, %v506
      %v509 = vadd.f32 %v499, %v507
      %510 = vset.pattern.permute.xlu0 15
      %511 = vperm.xlu0 %510, %v225
      %v512 = vpop.permute.xlu0 %511
      %v514 = vperm.slane %v341, 1
      %v515 = vperm.slane %v342, 1
      %v516 = vmul.f32 %v512, %v514
      %v517 = vmul.f32 %v512, %v515
      %v518 = vadd.f32 %v508, %v516
      %v519 = vadd.f32 %v509, %v517
      %520 = vset.pattern.permute.xlu0 16
      %521 = vperm.xlu0 %520, %v225
      %v522 = vpop.permute.xlu0 %521
      %v524 = vperm.slane %v279, 1
      %v525 = vperm.slane %v280, 1
      %v526 = vmul.f32 %v522, %v524
      %v527 = vmul.f32 %v522, %v525
      %v528 = vadd.f32 %v518, %v526
      %v529 = vadd.f32 %v519, %v527
      %530 = vset.pattern.permute.xlu0 17
      %531 = vperm.xlu0 %530, %v225
      %v532 = vpop.permute.xlu0 %531
      %v534 = vperm.slane %v349, 1
      %v535 = vperm.slane %v350, 1
      %v536 = vmul.f32 %v532, %v534
      %v537 = vmul.f32 %v532, %v535
      %v538 = vadd.f32 %v528, %v536
      %v539 = vadd.f32 %v529, %v537
      %540 = vset.pattern.permute.xlu0 18
      %541 = vperm.xlu0 %540, %v225
      %v542 = vpop.permute.xlu0 %541
      %v544 = vperm.slane %v288, 2
      %v545 = vperm.slane %v289, 2
      %v546 = vmul.f32 %v542, %v544
      %v547 = vmul.f32 %v542, %v545
      %v548 = vadd.f32 %v538, %v546
      %v549 = vadd.f32 %v539, %v547
      %550 = vset.pattern.permute.xlu0 19
      %551 = vperm.xlu0 %550, %v225
      %v552 = vpop.permute.xlu0 %551
      %v554 = vperm.slane %v260, 2
      %v555 = vperm.slane %v261, 2
      %v556 = vmul.f32 %v552, %v554
      %v557 = vmul.f32 %v552, %v555
      %v558 = vadd.f32 %v548, %v556
      %v559 = vadd.f32 %v549, %v557
      %560 = vset.pattern.permute.xlu0 20
      %561 = vperm.xlu0 %560, %v225
      %v562 = vpop.permute.xlu0 %561
      %v564 = vperm.slane %v297, 2
      %v565 = vperm.slane %v298, 2
      %v566 = vmul.f32 %v562, %v564
      %v567 = vmul.f32 %v562, %v565
      %v568 = vadd.f32 %v558, %v566
      %v569 = vadd.f32 %v559, %v567
      %570 = vset.pattern.permute.xlu0 21
      %571 = vperm.xlu0 %570, %v225
      %v572 = vpop.permute.xlu0 %571
      %v574 = vperm.slane %v315, 2
      %v575 = vperm.slane %v316, 2
      %v576 = vmul.f32 %v572, %v574
      %v577 = vmul.f32 %v572, %v575
      %v578 = vadd.f32 %v568, %v576
      %v579 = vadd.f32 %v569, %v577
      %580 = vset.pattern.permute.xlu0 22
      %581 = vperm.xlu0 %580, %v225
      %v582 = vpop.permute.xlu0 %581
      %v584 = vperm.slane %v242, 2
      %v585 = vperm.slane %v242, 6
      %v588 = vperm.slane %v584, 2
      %v589 = vperm.slane %v585, 2
      %v590 = vmul.f32 %v582, %v588
      %v591 = vmul.f32 %v582, %v589
      %v592 = vadd.f32 %v578, %v590
      %v593 = vadd.f32 %v579, %v591
      %594 = vset.pattern.permute.xlu0 23
      %595 = vperm.xlu0 %594, %v225
      %v596 = vpop.permute.xlu0 %595
      %v598 = vperm.slane %v333, 2
      %v599 = vperm.slane %v334, 2
      %v600 = vmul.f32 %v596, %v598
      %v601 = vmul.f32 %v596, %v599
      %v602 = vadd.f32 %v592, %v600
      %v603 = vadd.f32 %v593, %v601
      %604 = vset.pattern.permute.xlu0 24
      %605 = vperm.xlu0 %604, %v225
      %v606 = vpop.permute.xlu0 %605
      %v608 = vperm.slane %v341, 2
      %v609 = vperm.slane %v342, 2
      %v610 = vmul.f32 %v606, %v608
      %v611 = vmul.f32 %v606, %v609
      %v612 = vadd.f32 %v602, %v610
      %v613 = vadd.f32 %v603, %v611
      %614 = vset.pattern.permute.xlu0 25
      %615 = vperm.xlu0 %614, %v225
      %v616 = vpop.permute.xlu0 %615
      %v618 = vperm.slane %v279, 2
      %v619 = vperm.slane %v280, 2
      %v620 = vmul.f32 %v616, %v618
      %v621 = vmul.f32 %v616, %v619
      %v622 = vadd.f32 %v612, %v620
      %v623 = vadd.f32 %v613, %v621
      %624 = vset.pattern.permute.xlu0 26
      %625 = vperm.xlu0 %624, %v225
      %v626 = vpop.permute.xlu0 %625
      %v628 = vperm.slane %v349, 2
      %v629 = vperm.slane %v350, 2
      %v630 = vmul.f32 %v626, %v628
      %v631 = vmul.f32 %v626, %v629
      %v632 = vadd.f32 %v622, %v630
      %v633 = vadd.f32 %v623, %v631
      %634 = vset.pattern.permute.xlu0 27
      %635 = vperm.xlu0 %634, %v225
      %v636 = vpop.permute.xlu0 %635
      %v638 = vperm.slane %v288, 3
      %v639 = vperm.slane %v289, 3
      %v640 = vmul.f32 %v636, %v638
      %v641 = vmul.f32 %v636, %v639
      %v642 = vadd.f32 %v632, %v640
      %v643 = vadd.f32 %v633, %v641
      %644 = vset.pattern.permute.xlu0 28
      %645 = vperm.xlu0 %644, %v225
      %v646 = vpop.permute.xlu0 %645
      %v648 = vperm.slane %v260, 3
      %v649 = vperm.slane %v261, 3
      %v650 = vmul.f32 %v646, %v648
      %v651 = vmul.f32 %v646, %v649
      %v652 = vadd.f32 %v642, %v650
      %v653 = vadd.f32 %v643, %v651
      %654 = vset.pattern.permute.xlu0 29
      %655 = vperm.xlu0 %654, %v225
      %v656 = vpop.permute.xlu0 %655
      %v658 = vperm.slane %v297, 3
      %v659 = vperm.slane %v298, 3
      %v660 = vmul.f32 %v656, %v658
      %v661 = vmul.f32 %v656, %v659
      %v662 = vadd.f32 %v652, %v660
      %v663 = vadd.f32 %v653, %v661
      %664 = vset.pattern.permute.xlu0 30
      %665 = vperm.xlu0 %664, %v225
      %v666 = vpop.permute.xlu0 %665
      %v668 = vperm.slane %v315, 3
      %v669 = vperm.slane %v316, 3
      %v670 = vmul.f32 %v666, %v668
      %v671 = vmul.f32 %v666, %v669
      %v672 = vadd.f32 %v662, %v670
      %v673 = vadd.f32 %v663, %v671
      %674 = vset.pattern.permute.xlu0 31
      %675 = vperm.xlu0 %674, %v225
      %v676 = vpop.permute.xlu0 %675
      %v678 = vperm.slane %v242, 3
      %v679 = vperm.slane %v242, 7
      %v682 = vperm.slane %v678, 3
      %v683 = vperm.slane %v679, 3
      %v684 = vmul.f32 %v676, %v682
      %v685 = vmul.f32 %v676, %v683
      %v686 = vadd.f32 %v672, %v684
      %v687 = vadd.f32 %v673, %v685
      %688 = vset.pattern.permute.xlu0 32
      %689 = vperm.xlu0 %688, %v225
      %v690 = vpop.permute.xlu0 %689
      %v692 = vperm.slane %v333, 3
      %v693 = vperm.slane %v334, 3
      %v694 = vmul.f32 %v690, %v692
      %v695 = vmul.f32 %v690, %v693
      %v696 = vadd.f32 %v686, %v694
      %v697 = vadd.f32 %v687, %v695
      %698 = vset.pattern.permute.xlu0 33
      %699 = vperm.xlu0 %698, %v225
      %v700 = vpop.permute.xlu0 %699
      %v702 = vperm.slane %v341, 3
      %v703 = vperm.slane %v342, 3
      %v704 = vmul.f32 %v700, %v702
      %v705 = vmul.f32 %v700, %v703
      %v706 = vadd.f32 %v696, %v704
      %v707 = vadd.f32 %v697, %v705
      %708 = vset.pattern.permute.xlu0 34
      %709 = vperm.xlu0 %708, %v225
      %v710 = vpop.permute.xlu0 %709
      %v712 = vperm.slane %v279, 3
      %v713 = vperm.slane %v280, 3
      %v714 = vmul.f32 %v710, %v712
      %v715 = vmul.f32 %v710, %v713
      %v716 = vadd.f32 %v706, %v714
      %v717 = vadd.f32 %v707, %v715
      %718 = vset.pattern.permute.xlu0 35
      %719 = vperm.xlu0 %718, %v225
      %v720 = vpop.permute.xlu0 %719
      %v722 = vperm.slane %v349, 3
      %v723 = vperm.slane %v350, 3
      %v724 = vmul.f32 %v720, %v722
      %v725 = vmul.f32 %v720, %v723
      %v726 = vadd.f32 %v716, %v724
      %v727 = vadd.f32 %v717, %v725
      %729 = vset.pattern.permute.xlu0 0
      %730 = vperm.xlu0 %729, %v226
      %v731 = vpop.permute.xlu0 %730
      %v733 = vadd.f32 %v726, %v731
      %v734 = vadd.f32 %v727, %v731
      %vm735 = vcmask 1043456
      %v736 = vsel %vm735, %v733, 0.0
      %v737 = vsel %vm735, %v734, 0.0
      %v738 = vadd.f32 %v736, %v737
      %739 = vadd.xlane.f32.xlu0 %v738
      %v740 = vpop.xlane.xlu0 %739
      %v741 = vrcp.pop 256.0
      %v742 = vmul.f32 256.0, %v741
      %v743 = vsub.f32 1.0, %v742
      %v744 = vmul.f32 %v741, %v743
      %v745 = vadd.f32 %v741, %v744
      %vm746 = vweird.f32 %v741
      %v747 = vsel %vm746, %v741, %v745
      %v748 = vmul.f32 %v740, %v747
      %v749 = vsub.f32 %v733, %v748
      %v750 = vsub.f32 %v734, %v748
      %v751 = vmul.f32 %v749, %v749
      %v752 = vmul.f32 %v750, %v750
      %v753 = vsel %vm735, %v751, 0.0
      %v754 = vsel %vm735, %v752, 0.0
      %v755 = vadd.f32 %v753, %v754
      %756 = vadd.xlane.f32.xlu0 %v755
      %v757 = vpop.xlane.xlu0 %756
      %v758 = vmul.f32 %v757, %v747
      %v759 = vadd.f32 %v758, 1e-05
      %v760 = vrsqrt.pop %v759
      %v761 = vmul.f32 %v760, %v759
      %v762 = vmul.f32 %v761, %v760
      %v763 = vmul.f32 0.5, %v762
      %v764 = vsub.f32 1.5, %v763
      %v765 = vmul.f32 %v760, %v764
      %vm766 = vweird.f32 %v759
      %vm767 = vweird.f32 %v760
      %vm768 = vmor %vm766, %vm767
      %v769 = vsel %vm768, %v760, %v765
      %v770 = vmul.f32 %v749, %v769
      %v771 = vmul.f32 %v750, %v769
      %v772 = vmul.f32 %v770, 0.01
      %v773 = vmul.f32 %v771, 0.01
      %v774 = vmax.f32 %v770, %v772
      %v775 = vmax.f32 %v771, %v773
      %776 = vrot.lane.b32.xlu0 %v774, 16
      %v777 = vpop.permute.xlu0 %776
      %778 = vrot.lane.b32.xlu0 %v775, 16
      %v779 = vpop.permute.xlu0 %778
      %v780 = vsel %vm234, %v777, %v779
      %v781 = vsel %vm234, %v779, %v777
      %v782 = vsel %vm234, %v774, %v781
      %v783 = vsel %vm235, %v775, %v780
      %784 = vrot.lane.b32.xlu0 %v774, 112
      %v785 = vpop.permute.xlu0 %784
      %786 = vrot.lane.b32.xlu0 %v775, 112
      %v787 = vpop.permute.xlu0 %786
      %v788 = vsel %vm271, %v785, %v787
      %v789 = vsel %vm271, %v787, %v785
      %v790 = vsel %vm236, %v774, %v788
      %v791 = vsel %vm237, %v775, %v789
      %792 = vrot.lane.b32.xlu0 %v782, 1
      %v793 = vpop.permute.xlu0 %792
      %794 = vrot.lane.b32.xlu0 %v783, 1
      %v795 = vpop.permute.xlu0 %794
      %v796 = vsel %vm285, %v793, %v795
      %v797 = vsel %vm285, %v795, %v793
      %v798 = vsel %vm238, %v782, %v797
      %v799 = vsel %vm239, %v783, %v796
      %800 = vrot.lane.b32.xlu0 %v782, 127
      %v801 = vpop.permute.xlu0 %800
      %802 = vrot.lane.b32.xlu0 %v783, 127
      %v803 = vpop.permute.xlu0 %802
      %v804 = vsel %vm294, %v801, %v803
      %v805 = vsel %vm294, %v803, %v801
      %v806 = vsel %vm240, %v782, %v804
      %v807 = vsel %vm241, %v783, %v805
      %808 = vrot.lane.b32.xlu0 %v774, 1
      %v809 = vpop.permute.xlu0 %808
      %810 = vrot.lane.b32.xlu0 %v775, 1
      %v811 = vpop.permute.xlu0 %810
      %v812 = vsel %vm285, %v809, %v811
      %v813 = vsel %vm285, %v811, %v809
      %v814 = vsel %vm238, %v774, %v813
      %v815 = vsel %vm239, %v775, %v812
      %816 = vrot.lane.b32.xlu0 %v774, 127
      %v817 = vpop.permute.xlu0 %816
      %818 = vrot.lane.b32.xlu0 %v775, 127
      %v819 = vpop.permute.xlu0 %818
      %v820 = vsel %vm294, %v817, %v819
      %v821 = vsel %vm294, %v819, %v817
      %v822 = vsel %vm240, %v774, %v820
      %v823 = vsel %vm241, %v775, %v821
      %824 = vrot.lane.b32.xlu0 %v790, 1
      %v825 = vpop.permute.xlu0 %824
      %826 = vrot.lane.b32.xlu0 %v791, 1
      %v827 = vpop.permute.xlu0 %826
      %v828 = vsel %vm285, %v825, %v827
      %v829 = vsel %vm285, %v827, %v825
      %v830 = vsel %vm238, %v790, %v829
      %v831 = vsel %vm239, %v791, %v828
      %832 = vrot.lane.b32.xlu0 %v790, 127
      %v833 = vpop.permute.xlu0 %832
      %834 = vrot.lane.b32.xlu0 %v791, 127
      %v835 = vpop.permute.xlu0 %834
      %v836 = vsel %vm294, %v833, %v835
      %v837 = vsel %vm294, %v835, %v833
      %v838 = vsel %vm240, %v790, %v836
      %v839 = vsel %vm241, %v791, %v837
      %841 = vset.pattern.permute.xlu0 0
      %842 = vperm.xlu0 %841, %v227
      %v843 = vpop.permute.xlu0 %842
      %v845 = vperm.slane %v798, 0
      %v846 = vperm.slane %v799, 0
      %v847 = vmul.f32 %v843, %v845
      %v848 = vmul.f32 %v843, %v846
      %v849 = vadd.f32 %v847, 0.0
      %v850 = vadd.f32 %v848, 0.0
      %851 = vset.pattern.permute.xlu0 1
      %852 = vperm.xlu0 %851, %v227
      %v853 = vpop.permute.xlu0 %852
      %v855 = vperm.slane %v782, 0
      %v856 = vperm.slane %v783, 0
      %v857 = vmul.f32 %v853, %v855
      %v858 = vmul.f32 %v853, %v856
      %v859 = vadd.f32 %v849, %v857
      %v860 = vadd.f32 %v850, %v858
      %861 = vset.pattern.permute.xlu0 2
      %862 = vperm.xlu0 %861, %v227
      %v863 = vpop.permute.xlu0 %862
      %v865 = vperm.slane %v806, 0
      %v866 = vperm.slane %v807, 0
      %v867 = vmul.f32 %v863, %v865
      %v868 = vmul.f32 %v863, %v866
      %v869 = vadd.f32 %v859, %v867
      %v870 = vadd.f32 %v860, %v868
      %871 = vset.pattern.permute.xlu0 3
      %872 = vperm.xlu0 %871, %v227
      %v873 = vpop.permute.xlu0 %872
      %v875 = vperm.slane %v814, 0
      %v876 = vperm.slane %v815, 0
      %v877 = vmul.f32 %v873, %v875
      %v878 = vmul.f32 %v873, %v876
      %v879 = vadd.f32 %v869, %v877
      %v880 = vadd.f32 %v870, %v878
      %881 = vset.pattern.permute.xlu0 4
      %882 = vperm.xlu0 %881, %v227
      %v883 = vpop.permute.xlu0 %882
      %v885 = vperm.slane %v774, 0
      %v886 = vperm.slane %v775, 0
      %v887 = vmul.f32 %v883, %v885
      %v888 = vmul.f32 %v883, %v886
      %v889 = vadd.f32 %v879, %v887
      %v890 = vadd.f32 %v880, %v888
      %891 = vset.pattern.permute.xlu0 5
      %892 = vperm.xlu0 %891, %v227
      %v893 = vpop.permute.xlu0 %892
      %v895 = vperm.slane %v822, 0
      %v896 = vperm.slane %v823, 0
      %v897 = vmul.f32 %v893, %v895
      %v898 = vmul.f32 %v893, %v896
      %v899 = vadd.f32 %v889, %v897
      %v900 = vadd.f32 %v890, %v898
      %901 = vset.pattern.permute.xlu0 6
      %902 = vperm.xlu0 %901, %v227
      %v903 = vpop.permute.xlu0 %902
      %v905 = vperm.slane %v830, 0
      %v906 = vperm.slane %v831, 0
      %v907 = vmul.f32 %v903, %v905
      %v908 = vmul.f32 %v903, %v906
      %v909 = vadd.f32 %v899, %v907
      %v910 = vadd.f32 %v900, %v908
      %911 = vset.pattern.permute.xlu0 7
      %912 = vperm.xlu0 %911, %v227
      %v913 = vpop.permute.xlu0 %912
      %v915 = vperm.slane %v790, 0
      %v916 = vperm.slane %v791, 0
      %v917 = vmul.f32 %v913, %v915
      %v918 = vmul.f32 %v913, %v916
      %v919 = vadd.f32 %v909, %v917
      %v920 = vadd.f32 %v910, %v918
      %921 = vset.pattern.permute.xlu0 8
      %922 = vperm.xlu0 %921, %v227
      %v923 = vpop.permute.xlu0 %922
      %v925 = vperm.slane %v838, 0
      %v926 = vperm.slane %v839, 0
      %v927 = vmul.f32 %v923, %v925
      %v928 = vmul.f32 %v923, %v926
      %v929 = vadd.f32 %v919, %v927
      %v930 = vadd.f32 %v920, %v928
      %931 = vset.pattern.permute.xlu0 9
      %932 = vperm.xlu0 %931, %v227
      %v933 = vpop.permute.xlu0 %932
      %v935 = vperm.slane %v798, 1
      %v936 = vperm.slane %v799, 1
      %v937 = vmul.f32 %v933, %v935
      %v938 = vmul.f32 %v933, %v936
      %v939 = vadd.f32 %v929, %v937
      %v940 = vadd.f32 %v930, %v938
      %941 = vset.pattern.permute.xlu0 10
      %942 = vperm.xlu0 %941, %v227
      %v943 = vpop.permute.xlu0 %942
      %v945 = vperm.slane %v782, 1
      %v946 = vperm.slane %v783, 1
      %v947 = vmul.f32 %v943, %v945
      %v948 = vmul.f32 %v943, %v946
      %v949 = vadd.f32 %v939, %v947
      %v950 = vadd.f32 %v940, %v948
      %951 = vset.pattern.permute.xlu0 11
      %952 = vperm.xlu0 %951, %v227
      %v953 = vpop.permute.xlu0 %952
      %v955 = vperm.slane %v806, 1
      %v956 = vperm.slane %v807, 1
      %v957 = vmul.f32 %v953, %v955
      %v958 = vmul.f32 %v953, %v956
      %v959 = vadd.f32 %v949, %v957
      %v960 = vadd.f32 %v950, %v958
      %961 = vset.pattern.permute.xlu0 12
      %962 = vperm.xlu0 %961, %v227
      %v963 = vpop.permute.xlu0 %962
      %v965 = vperm.slane %v814, 1
      %v966 = vperm.slane %v815, 1
      %v967 = vmul.f32 %v963, %v965
      %v968 = vmul.f32 %v963, %v966
      %v969 = vadd.f32 %v959, %v967
      %v970 = vadd.f32 %v960, %v968
      %971 = vset.pattern.permute.xlu0 13
      %972 = vperm.xlu0 %971, %v227
      %v973 = vpop.permute.xlu0 %972
      %v975 = vperm.slane %v774, 1
      %v976 = vperm.slane %v775, 1
      %v977 = vmul.f32 %v973, %v975
      %v978 = vmul.f32 %v973, %v976
      %v979 = vadd.f32 %v969, %v977
      %v980 = vadd.f32 %v970, %v978
      %981 = vset.pattern.permute.xlu0 14
      %982 = vperm.xlu0 %981, %v227
      %v983 = vpop.permute.xlu0 %982
      %v985 = vperm.slane %v822, 1
      %v986 = vperm.slane %v823, 1
      %v987 = vmul.f32 %v983, %v985
      %v988 = vmul.f32 %v983, %v986
      %v989 = vadd.f32 %v979, %v987
      %v990 = vadd.f32 %v980, %v988
      %991 = vset.pattern.permute.xlu0 15
      %992 = vperm.xlu0 %991, %v227
      %v993 = vpop.permute.xlu0 %992
      %v995 = vperm.slane %v830, 1
      %v996 = vperm.slane %v831, 1
      %v997 = vmul.f32 %v993, %v995
      %v998 = vmul.f32 %v993, %v996
      %v999 = vadd.f32 %v989, %v997
      %v1000 = vadd.f32 %v990, %v998
      %1001 = vset.pattern.permute.xlu0 16
      %1002 = vperm.xlu0 %1001, %v227
      %v1003 = vpop.permute.xlu0 %1002
      %v1005 = vperm.slane %v790, 1
      %v1006 = vperm.slane %v791, 1
      %v1007 = vmul.f32 %v1003, %v1005
      %v1008 = vmul.f32 %v1003, %v1006
      %v1009 = vadd.f32 %v999, %v1007
      %v1010 = vadd.f32 %v1000, %v1008
      %1011 = vset.pattern.permute.xlu0 17
      %1012 = vperm.xlu0 %1011, %v227
      %v1013 = vpop.permute.xlu0 %1012
      %v1015 = vperm.slane %v838, 1
      %v1016 = vperm.slane %v839, 1
      %v1017 = vmul.f32 %v1013, %v1015
      %v1018 = vmul.f32 %v1013, %v1016
      %v1019 = vadd.f32 %v1009, %v1017
      %v1020 = vadd.f32 %v1010, %v1018
      %1021 = vset.pattern.permute.xlu0 18
      %1022 = vperm.xlu0 %1021, %v227
      %v1023 = vpop.permute.xlu0 %1022
      %v1025 = vperm.slane %v798, 2
      %v1026 = vperm.slane %v799, 2
      %v1027 = vmul.f32 %v1023, %v1025
      %v1028 = vmul.f32 %v1023, %v1026
      %v1029 = vadd.f32 %v1019, %v1027
      %v1030 = vadd.f32 %v1020, %v1028
      %1031 = vset.pattern.permute.xlu0 19
      %1032 = vperm.xlu0 %1031, %v227
      %v1033 = vpop.permute.xlu0 %1032
      %v1035 = vperm.slane %v782, 2
      %v1036 = vperm.slane %v783, 2
      %v1037 = vmul.f32 %v1033, %v1035
      %v1038 = vmul.f32 %v1033, %v1036
      %v1039 = vadd.f32 %v1029, %v1037
      %v1040 = vadd.f32 %v1030, %v1038
      %1041 = vset.pattern.permute.xlu0 20
      %1042 = vperm.xlu0 %1041, %v227
      %v1043 = vpop.permute.xlu0 %1042
      %v1045 = vperm.slane %v806, 2
      %v1046 = vperm.slane %v807, 2
      %v1047 = vmul.f32 %v1043, %v1045
      %v1048 = vmul.f32 %v1043, %v1046
      %v1049 = vadd.f32 %v1039, %v1047
      %v1050 = vadd.f32 %v1040, %v1048
      %1051 = vset.pattern.permute.xlu0 21
      %1052 = vperm.xlu0 %1051, %v227
      %v1053 = vpop.permute.xlu0 %1052
      %v1055 = vperm.slane %v814, 2
      %v1056 = vperm.slane %v815, 2
      %v1057 = vmul.f32 %v1053, %v1055
      %v1058 = vmul.f32 %v1053, %v1056
      %v1059 = vadd.f32 %v1049, %v1057
      %v1060 = vadd.f32 %v1050, %v1058
      %1061 = vset.pattern.permute.xlu0 22
      %1062 = vperm.xlu0 %1061, %v227
      %v1063 = vpop.permute.xlu0 %1062
      %v1065 = vperm.slane %v774, 2
      %v1066 = vperm.slane %v775, 2
      %v1067 = vmul.f32 %v1063, %v1065
      %v1068 = vmul.f32 %v1063, %v1066
      %v1069 = vadd.f32 %v1059, %v1067
      %v1070 = vadd.f32 %v1060, %v1068
      %1071 = vset.pattern.permute.xlu0 23
      %1072 = vperm.xlu0 %1071, %v227
      %v1073 = vpop.permute.xlu0 %1072
      %v1075 = vperm.slane %v822, 2
      %v1076 = vperm.slane %v823, 2
      %v1077 = vmul.f32 %v1073, %v1075
      %v1078 = vmul.f32 %v1073, %v1076
      %v1079 = vadd.f32 %v1069, %v1077
      %v1080 = vadd.f32 %v1070, %v1078
      %1081 = vset.pattern.permute.xlu0 24
      %1082 = vperm.xlu0 %1081, %v227
      %v1083 = vpop.permute.xlu0 %1082
      %v1085 = vperm.slane %v830, 2
      %v1086 = vperm.slane %v831, 2
      %v1087 = vmul.f32 %v1083, %v1085
      %v1088 = vmul.f32 %v1083, %v1086
      %v1089 = vadd.f32 %v1079, %v1087
      %v1090 = vadd.f32 %v1080, %v1088
      %1091 = vset.pattern.permute.xlu0 25
      %1092 = vperm.xlu0 %1091, %v227
      %v1093 = vpop.permute.xlu0 %1092
      %v1095 = vperm.slane %v790, 2
      %v1096 = vperm.slane %v791, 2
      %v1097 = vmul.f32 %v1093, %v1095
      %v1098 = vmul.f32 %v1093, %v1096
      %v1099 = vadd.f32 %v1089, %v1097
      %v1100 = vadd.f32 %v1090, %v1098
      %1101 = vset.pattern.permute.xlu0 26
      %1102 = vperm.xlu0 %1101, %v227
      %v1103 = vpop.permute.xlu0 %1102
      %v1105 = vperm.slane %v838, 2
      %v1106 = vperm.slane %v839, 2
      %v1107 = vmul.f32 %v1103, %v1105
      %v1108 = vmul.f32 %v1103, %v1106
      %v1109 = vadd.f32 %v1099, %v1107
      %v1110 = vadd.f32 %v1100, %v1108
      %1111 = vset.pattern.permute.xlu0 27
      %1112 = vperm.xlu0 %1111, %v227
      %v1113 = vpop.permute.xlu0 %1112
      %v1115 = vperm.slane %v798, 3
      %v1116 = vperm.slane %v799, 3
      %v1117 = vmul.f32 %v1113, %v1115
      %v1118 = vmul.f32 %v1113, %v1116
      %v1119 = vadd.f32 %v1109, %v1117
      %v1120 = vadd.f32 %v1110, %v1118
      %1121 = vset.pattern.permute.xlu0 28
      %1122 = vperm.xlu0 %1121, %v227
      %v1123 = vpop.permute.xlu0 %1122
      %v1125 = vperm.slane %v782, 3
      %v1126 = vperm.slane %v783, 3
      %v1127 = vmul.f32 %v1123, %v1125
      %v1128 = vmul.f32 %v1123, %v1126
      %v1129 = vadd.f32 %v1119, %v1127
      %v1130 = vadd.f32 %v1120, %v1128
      %1131 = vset.pattern.permute.xlu0 29
      %1132 = vperm.xlu0 %1131, %v227
      %v1133 = vpop.permute.xlu0 %1132
      %v1135 = vperm.slane %v806, 3
      %v1136 = vperm.slane %v807, 3
      %v1137 = vmul.f32 %v1133, %v1135
      %v1138 = vmul.f32 %v1133, %v1136
      %v1139 = vadd.f32 %v1129, %v1137
      %v1140 = vadd.f32 %v1130, %v1138
      %1141 = vset.pattern.permute.xlu0 30
      %1142 = vperm.xlu0 %1141, %v227
      %v1143 = vpop.permute.xlu0 %1142
      %v1145 = vperm.slane %v814, 3
      %v1146 = vperm.slane %v815, 3
      %v1147 = vmul.f32 %v1143, %v1145
      %v1148 = vmul.f32 %v1143, %v1146
      %v1149 = vadd.f32 %v1139, %v1147
      %v1150 = vadd.f32 %v1140, %v1148
      %1151 = vset.pattern.permute.xlu0 31
      %1152 = vperm.xlu0 %1151, %v227
      %v1153 = vpop.permute.xlu0 %1152
      %v1155 = vperm.slane %v774, 3
      %v1156 = vperm.slane %v775, 3
      %v1157 = vmul.f32 %v1153, %v1155
      %v1158 = vmul.f32 %v1153, %v1156
      %v1159 = vadd.f32 %v1149, %v1157
      %v1160 = vadd.f32 %v1150, %v1158
      %1161 = vset.pattern.permute.xlu0 32
      %1162 = vperm.xlu0 %1161, %v227
      %v1163 = vpop.permute.xlu0 %1162
      %v1165 = vperm.slane %v822, 3
      %v1166 = vperm.slane %v823, 3
      %v1167 = vmul.f32 %v1163, %v1165
      %v1168 = vmul.f32 %v1163, %v1166
      %v1169 = vadd.f32 %v1159, %v1167
      %v1170 = vadd.f32 %v1160, %v1168
      %1171 = vset.pattern.permute.xlu0 33
      %1172 = vperm.xlu0 %1171, %v227
      %v1173 = vpop.permute.xlu0 %1172
      %v1175 = vperm.slane %v830, 3
      %v1176 = vperm.slane %v831, 3
      %v1177 = vmul.f32 %v1173, %v1175
      %v1178 = vmul.f32 %v1173, %v1176
      %v1179 = vadd.f32 %v1169, %v1177
      %v1180 = vadd.f32 %v1170, %v1178
      %1181 = vset.pattern.permute.xlu0 34
      %1182 = vperm.xlu0 %1181, %v227
      %v1183 = vpop.permute.xlu0 %1182
      %v1185 = vperm.slane %v790, 3
      %v1186 = vperm.slane %v791, 3
      %v1187 = vmul.f32 %v1183, %v1185
      %v1188 = vmul.f32 %v1183, %v1186
      %v1189 = vadd.f32 %v1179, %v1187
      %v1190 = vadd.f32 %v1180, %v1188
      %1191 = vset.pattern.permute.xlu0 35
      %1192 = vperm.xlu0 %1191, %v227
      %v1193 = vpop.permute.xlu0 %1192
      %v1195 = vperm.slane %v838, 3
      %v1196 = vperm.slane %v839, 3
      %v1197 = vmul.f32 %v1193, %v1195
      %v1198 = vmul.f32 %v1193, %v1196
      %v1199 = vadd.f32 %v1189, %v1197
      %v1200 = vadd.f32 %v1190, %v1198
      %1202 = vset.pattern.permute.xlu0 0
      %1203 = vperm.xlu0 %1202, %v228
      %v1204 = vpop.permute.xlu0 %1203
      %v1206 = vadd.f32 %v1199, %v1204
      %v1207 = vadd.f32 %v1200, %v1204
      %v1208 = vsel %vm735, %v1206, 0.0
      %v1209 = vsel %vm735, %v1207, 0.0
      %v1210 = vadd.f32 %v1208, %v1209
      %1211 = vadd.xlane.f32.xlu0 %v1210
      %v1212 = vpop.xlane.xlu0 %1211
      %v1213 = vmul.f32 %v1212, %v747
      %v1214 = vsub.f32 %v1206, %v1213
      %v1215 = vsub.f32 %v1207, %v1213
      %v1216 = vmul.f32 %v1214, %v1214
      %v1217 = vmul.f32 %v1215, %v1215
      %v1218 = vsel %vm735, %v1216, 0.0
      %v1219 = vsel %vm735, %v1217, 0.0
      %v1220 = vadd.f32 %v1218, %v1219
      %1221 = vadd.xlane.f32.xlu0 %v1220
      %v1222 = vpop.xlane.xlu0 %1221
      %v1223 = vmul.f32 %v1222, %v747
      %v1224 = vadd.f32 %v1223, 1e-05
      %v1225 = vrsqrt.pop %v1224
      %v1226 = vmul.f32 %v1225, %v1224
      %v1227 = vmul.f32 %v1226, %v1225
      %v1228 = vmul.f32 0.5, %v1227
      %v1229 = vsub.f32 1.5, %v1228
      %v1230 = vmul.f32 %v1225, %v1229
      %vm1231 = vweird.f32 %v1224
      %vm1232 = vweird.f32 %v1225
      %vm1233 = vmor %vm1231, %vm1232
      %v1234 = vsel %vm1233, %v1225, %v1230
      %v1235 = vmul.f32 %v1214, %v1234
      %v1236 = vmul.f32 %v1215, %v1234
      %v1239 = vrot.slane %v1236, 4
      %v1240 = vsel %vm735, %v1235, %v1239
      %v1242 = vadd.f32 %v242, %v1240
      %v1243 = vmul.f32 %v1242, 0.7092199
      %1244 = vst [vmem:[%s224] sm:$0xff] %v1243
      %p1245 = scmp.lt.s32.totalorder %s16, 1
      %s1246 = scalar_select %p1245, %s16, 1
      %s1247 = smul.addr %s1246, 2
      %s1248 = smul.addr %s1247, 4
      %s1249 = scalar_lea.vmem %s5, %s1248
      // Predicated region
      $region41: #{res_block_forward.1} parent=39 // pred_check
        %p1250 = pneg %p144
      $region42: #{res_block_forward.1} parent=39 // pred_check_branch
        %1252 = sbr.rel (%p1250) target = $region44
      $region43: #{res_block_forward.1} parent=39 // pred_region
        _
      $region44: #{res_block_forward.1} parent=39 // pred_fallthru
        _
    $region40: #{res_block_forward.1} parent=5 // pred_fallthru
      _
    %p1253 = scmp.le.s32.totalorder 2, %s11
    // Predicated region
    $region45: #{res_block_forward.1} parent=5 // pred_check
      %p1254 = pneg %p1253
    $region46: #{res_block_forward.1} parent=5 // pred_check_branch
      %1256 = sbr.rel (%p1254) target = $region48
    $region47: #{res_block_forward.1} parent=5 // pred_region
      %s1257 = ssub.s32 %s11, 2
      // Predicated region
      $region49: #{res_block_forward.1} parent=47 // pred_check
        %p1258 = pneg %p150
      $region50: #{res_block_forward.1} parent=47 // pred_check_branch
        %1260 = sbr.rel (%p1258) target = $region52
      $region51: #{res_block_forward.1} parent=47 // pred_region
        %p1261 = scmp.lt.s32.totalorder %s17, 1
        %s1262 = scalar_select %p1261, %s17, 1
        %s1263 = smul.addr %s1262, 2
        %s1264 = smul.addr %s1263, 4
        %s1265 = scalar_lea.vmem %s5, %s1264
      $region52: #{res_block_forward.1} parent=47 // pred_fallthru
        _
    $region48: #{res_block_forward.1} parent=5 // pred_fallthru
      _
  $region6: #{res_block_forward.1} parent=0 // loop_footer
    %s15 = sadd.s32 1, %s11
  $region7: #{res_block_forward.1} parent=0 // loop_footer_branch
    %10 = sbr.rel target = $region3
  $region8: #{res_block_forward.1} parent=0 // loop_exit
    _

</llo_original>
